<compile_context>
chip_gen: v5e
topology: v5e:2x2
jax: 0.10.0
libtpu: 0.0.40
codegen_flags: <defaults>
</compile_context>

<pallas_src>
import functools
import math

import jax
import jax.numpy as jnp
from jax.experimental import pallas as pl
from jax.experimental.pallas import tpu as pltpu


def _detect_vmem_limit():
    """~3/4 of physical VMEM: ≈96 MiB on v5e/v6e (128 MiB), ≈48 MiB on v7x."""
    try:
        info = pltpu.get_tpu_info()
        cap = getattr(info, "vmem_capacity_bytes", None)
        if cap:
            return int(min(cap * 3 // 4, 96 * 1024 * 1024))
    except Exception:
        pass
    return 48 * 1024 * 1024


_VMEM_LIMIT = _detect_vmem_limit()


def _cdiv(a, b):
    return (a + b - 1) // b


def _round_up(x, m):
    return _cdiv(x, m) * m


def _row_tile(M, max_tile=512):
    """Row tile <= max_tile with bounded padding waste (review formula)."""
    n_tiles = _cdiv(M, max_tile)
    tm = _round_up(_cdiv(M, n_tiles), 8)
    Mp = _round_up(M, tm)
    return tm, Mp


def _pad_rows(x2d, Mp):
    M = x2d.shape[0]
    if Mp == M:
        return x2d
    return jnp.pad(x2d, ((0, Mp - M), (0, 0)))


# ----------------------------- Pallas kernels -----------------------------

def _linear_kernel(*refs, activation, has_ln, has_res, eps):
    """Optionally LayerNorm(x) -> x @ w + b -> optional ReLU -> + residual."""
    idx = 0
    x_ref = refs[idx]; idx += 1
    if has_ln:
        g_ref = refs[idx]; bln_ref = refs[idx + 1]; idx += 2
    w_ref = refs[idx]; idx += 1
    b_ref = refs[idx]; idx += 1
    if has_res:
        r_ref = refs[idx]; idx += 1
    o_ref = refs[idx]

    if has_ln:
        x = x_ref[...].astype(jnp.float32)                 # LN math in f32
        mu = jnp.mean(x, axis=-1, keepdims=True)
        var = jnp.mean((x - mu) ** 2, axis=-1, keepdims=True)
        x = (x - mu) * jax.lax.rsqrt(var + eps) * g_ref[...] + bln_ref[...]
        xb = x.astype(jnp.bfloat16)
    else:
        xb = x_ref[...].astype(jnp.bfloat16)               # no-op if already bf16
    y = jnp.dot(xb, w_ref[...], preferred_element_type=jnp.float32)  # bf16 MXU
    y = y + b_ref[...]
    if activation == "relu":
        y = jnp.maximum(y, 0.0)
    if has_res:
        y = y + r_ref[...].astype(jnp.float32)
    o_ref[...] = y.astype(o_ref.dtype)


def fused_linear(x2d, w_bf16, b_row, *, ln=None, residual=None,
                 activation="none", eps=1e-5, out_dtype=jnp.bfloat16,
                 max_row_tile=512):
    """x2d: (M, K); w_bf16: (K, N) bf16; b_row: (1, N) f32. Row-tiled grid."""
    M, K = x2d.shape
    _, N = w_bf16.shape
    tm, Mp = _row_tile(M, max_row_tile)

    args = [_pad_rows(x2d, Mp)]
    in_specs = [pl.BlockSpec((tm, K), lambda i: (i, 0))]
    if ln is not None:
        gamma_row, beta_row = ln
        args += [gamma_row, beta_row]
        in_specs += [pl.BlockSpec((1, K), lambda i: (0, 0)),
                     pl.BlockSpec((1, K), lambda i: (0, 0))]
    args += [w_bf16, b_row]
    in_specs += [pl.BlockSpec((K, N), lambda i: (0, 0)),
                 pl.BlockSpec((1, N), lambda i: (0, 0))]
    if residual is not None:
        args.append(_pad_rows(residual, Mp))
        in_specs.append(pl.BlockSpec((tm, N), lambda i: (i, 0)))

    out = pl.pallas_call(
        functools.partial(_linear_kernel, activation=activation,
                          has_ln=ln is not None, has_res=residual is not None,
                          eps=eps),
        out_shape=jax.ShapeDtypeStruct((Mp, N), out_dtype),
        grid=(Mp // tm,),
        in_specs=in_specs,
        out_specs=pl.BlockSpec((tm, N), lambda i: (i, 0)),
        compiler_params=pltpu.CompilerParams(
            dimension_semantics=("parallel",),
            vmem_limit_bytes=_VMEM_LIMIT),
    )(*args)
    return out[:M] if Mp != M else out


def _layernorm_kernel(x_ref, g_ref, b_ref, o_ref, *, eps):
    x = x_ref[...].astype(jnp.float32)
    mu = jnp.mean(x, axis=-1, keepdims=True)
    var = jnp.mean((x - mu) ** 2, axis=-1, keepdims=True)
    o_ref[...] = (x - mu) * jax.lax.rsqrt(var + eps) * g_ref[...] + b_ref[...]


def layer_norm(x2d, gamma_row, beta_row, eps=1e-5, max_row_tile=512):
    """LayerNorm, f32 output (used for the final after_norm)."""
    M, D = x2d.shape
    tm, Mp = _row_tile(M, max_row_tile)
    out = pl.pallas_call(
        functools.partial(_layernorm_kernel, eps=eps),
        out_shape=jax.ShapeDtypeStruct((Mp, D), jnp.float32),
        grid=(Mp // tm,),
        in_specs=[pl.BlockSpec((tm, D), lambda i: (i, 0)),
                  pl.BlockSpec((1, D), lambda i: (0, 0)),
                  pl.BlockSpec((1, D), lambda i: (0, 0))],
        out_specs=pl.BlockSpec((tm, D), lambda i: (i, 0)),
        compiler_params=pltpu.CompilerParams(
            dimension_semantics=("parallel",),
            vmem_limit_bytes=_VMEM_LIMIT),
    )(_pad_rows(x2d, Mp), gamma_row, beta_row)
    return out[:M] if Mp != M else out


def _attention_kernel(qkv_ref, m_ref, o_ref, *, n_head, d_model):
    """Per-batch attention over the fused bf16 (T, 3D) QKV slab.

    Q is already pre-scaled by 1/sqrt(dk) (folded into the QKV weights).
    Each head is stored directly into its lane slice of the (T, D) output."""
    qkv = qkv_ref[0]                        # (T, 3D) bf16
    mask = m_ref[0]                         # (1, T) f32, 1.0 = valid key
    neg_bias = (1.0 - mask) * jnp.float32(-1e30)
    dk = d_model // n_head
    for h in range(n_head):
        qh = qkv[:, h * dk:(h + 1) * dk]
        kh = qkv[:, d_model + h * dk:d_model + (h + 1) * dk]
        vh = qkv[:, 2 * d_model + h * dk:2 * d_model + (h + 1) * dk]
        scores = jax.lax.dot_general(                       # contract dk, no K.T
            qh, kh, (((1,), (1,)), ((), ())),
            preferred_element_type=jnp.float32)             # (T, T) f32
        scores = scores + neg_bias
        mx = jnp.max(scores, axis=-1, keepdims=True)
        e = jnp.exp(scores - mx)                            # masked keys -> exact 0
        denom = jnp.sum(e, axis=-1, keepdims=True)
        attn = (e * pl.reciprocal(denom, approx=True)).astype(jnp.bfloat16)
        ctx_h = jnp.dot(attn, vh, preferred_element_type=jnp.float32)
        o_ref[0, :, h * dk:(h + 1) * dk] = ctx_h.astype(o_ref.dtype)


def attention(qkv, mask_f, *, n_head, d_model):
    """qkv: (B, T, 3D) bf16 fused projections; mask_f: (B, 1, T) f32 (1=valid)."""
    B, T, threeD = qkv.shape
    return pl.pallas_call(
        functools.partial(_attention_kernel, n_head=n_head, d_model=d_model),
        out_shape=jax.ShapeDtypeStruct((B, T, d_model), jnp.bfloat16),
        grid=(B,),
        in_specs=[pl.BlockSpec((1, T, threeD), lambda b: (b, 0, 0)),
                  pl.BlockSpec((1, 1, T), lambda b: (b, 0, 0))],
        out_specs=pl.BlockSpec((1, T, d_model), lambda b: (b, 0, 0)),
        compiler_params=pltpu.CompilerParams(
            dimension_semantics=("parallel",),
            vmem_limit_bytes=_VMEM_LIMIT),
    )(qkv, mask_f)


# ------------------------------- JAX glue ---------------------------------

def im2col_khkwc(x, k=3, s=2):
    """x: (B, H, W, C) channels-last -> (B, OH, OW, k*k*C); order (kh, kw, c)."""
    B, H, W, C = x.shape
    OH = (H - k) // s + 1
    OW = (W - k) // s + 1
    patches = []
    for kh in range(k):
        for kw in range(k):
            patches.append(x[:, kh:kh + s * OH:s, kw:kw + s * OW:s, :])
    return jnp.concatenate(patches, axis=-1)


def sinusoidal_pe(length, d_model):
    position = jnp.arange(length, dtype=jnp.float32)[:, None]
    div_term = jnp.exp(
        jnp.arange(0, d_model, 2, dtype=jnp.float32)
        * (-math.log(10000.0) / d_model))
    pe = jnp.zeros((length, d_model), dtype=jnp.float32)
    pe = pe.at[:, 0::2].set(jnp.sin(position * div_term))
    pe = pe.at[:, 1::2].set(jnp.cos(position * div_term))
    return pe


def conv2d_subsampling4(x, masks, ep, odim):
    """Conv2dSubsampling4 + abs_pos PositionalEncoding (dropout = identity)."""
    B, T, D = x.shape
    h = x.astype(jnp.bfloat16)[:, :, :, None]               # (B, T, D, 1) bf16
    # conv1: Conv2d(1, odim, 3, stride=2) + ReLU  (im2col + Pallas matmul)
    cols1 = im2col_khkwc(h)                                  # (B, T1, D1, 9)
    _, T1, D1, K1 = cols1.shape
    y1 = fused_linear(cols1.reshape(-1, K1), ep["conv1_w"], ep["conv1_b"],
                      activation="relu")
    y1 = y1.reshape(B, T1, D1, odim)                         # bf16
    # conv2: Conv2d(odim, odim, 3, stride=2) + ReLU  (im2col kept in bf16)
    cols2 = im2col_khkwc(y1)                                 # (B, T2, D2, 9*odim)
    _, T2, D2, K2 = cols2.shape
    y2 = fused_linear(cols2.reshape(-1, K2), ep["conv2_w"], ep["conv2_b"],
                      activation="relu")
    y2 = y2.reshape(B, T2, D2, odim)
    # lin_w rows were pre-permuted to this (freq, channel) layout, so a plain
    # reshape replaces the torch (B,C,T2,D2).transpose(1,2) HBM transpose.
    feat = y2.reshape(B, T2, D2 * odim)
    # Pad T2 once to a sublane multiple; all later kernels keep this shape.
    T2p = _round_up(T2, 8)
    if T2p != T2:
        feat = jnp.pad(feat, ((0, 0), (0, T2p - T2), (0, 0)))
    pe = sinusoidal_pe(T2p, odim)                            # (T2p, odim) f32
    pe_rows = jnp.broadcast_to(pe[None], (B, T2p, odim)) \
                 .reshape(-1, odim).astype(jnp.bfloat16)
    # PositionalEncoding(abs_pos): lin(feat) * sqrt(d) + pe
    #   sqrt(d) is pre-folded into lin_w/lin_b; pe enters as the fused residual.
    out = fused_linear(feat.reshape(-1, D2 * odim), ep["lin_w"], ep["lin_b"],
                       residual=pe_rows)
    out = out.reshape(B, T2p, odim)                          # bf16
    sub_masks = masks[:, :, 2::2][:, :, 2::2]                # (B, 1, T2) bool
    return out, pe[None, :T2, :], sub_masks, T2, T2p


def encoder_layer(x, mask_f, lp, n_head):
    """wenet TransformerEncoderLayer (normalize_before=True, concat_after=False)."""
    B, T, D = x.shape
    x2d = x.reshape(-1, D)                                   # bf16 residual stream
    # --- self-attention block: norm1 fused into the joint QKV matmul ---
    qkv = fused_linear(x2d, lp["w_qkv"], lp["b_qkv"],
                       ln=(lp["norm1_g"], lp["norm1_b"]))
    ctx = attention(qkv.reshape(B, T, 3 * D), mask_f, n_head=n_head, d_model=D)
    x2d = fused_linear(ctx.reshape(-1, D), lp["wo"], lp["bo"], residual=x2d)
    # --- feed-forward block: norm2 fused into FF1+ReLU; FF2 fused with residual ---
    hmid = fused_linear(x2d, lp["ff_w1"], lp["ff_b1"],
                        ln=(lp["norm2_g"], lp["norm2_b"]), activation="relu")
    x2d = fused_linear(hmid, lp["ff_w2"], lp["ff_b2"], residual=x2d)
    return x2d.reshape(B, T, D)


def base_encoder_forward(xs, xs_lens, params, *, n_head, odim,
                         s_ctc_layer=7, add_l_num_blocks=0):
    """BaseEncoder.forward (two_chunk=False, dual=False, no global_cmvn,
    no output_cache). Returns (s_xs, mask_pad, b_xs, mask_pad, [], [])."""
    B, T, D = xs.shape
    idx = jnp.arange(T)[None, :]
    masks = (idx < xs_lens[:, None])[:, None, :]             # ~make_pad_mask, (B,1,T)
    xs_e, pos_emb, sub_masks, T2, T2p = conv2d_subsampling4(
        xs, masks, params["embed"], odim)
    mask_pad = sub_masks                                     # (B, 1, T2) bool
    # add_optional_chunk_mask with default args -> chunk_masks = padding mask
    mask_f = sub_masks.astype(jnp.float32)
    if T2p != T2:
        mask_f = jnp.pad(mask_f, ((0, 0), (0, 0), (0, T2p - T2)))
    s_xs = xs_e
    split = s_ctc_layer - add_l_num_blocks
    for lp in params["layers"][:split]:
        s_xs = encoder_layer(s_xs, mask_f, lp, n_head)
    b_xs = s_xs
    for lp in params["layers"][split:]:
        b_xs = encoder_layer(b_xs, mask_f, lp, n_head)
    # normalize_before=True -> after_norm applied to both; slice padding off once.
    s_xs = layer_norm(s_xs.reshape(-1, odim), params["after_norm_g"],
                      params["after_norm_b"]).reshape(B, T2p, odim)[:, :T2]
    b_xs = layer_norm(b_xs.reshape(-1, odim), params["after_norm_g"],
                      params["after_norm_b"]).reshape(B, T2p, odim)[:, :T2]
    return s_xs, mask_pad, b_xs, mask_pad, [], []


# ------------------------- deterministic parameters ------------------------

def init_params(key, input_size, odim, n_head, linear_units, num_blocks):
    """Torch-layout, float32 parameters (stand-in for a loaded checkpoint)."""
    keys = iter(jax.random.split(key, 16 + 16 * num_blocks))

    def nrm(shape, scale=0.05):
        return scale * jax.random.normal(next(keys), shape, dtype=jnp.float32)

    f_after = ((input_size - 1) // 2 - 1) // 2    # freq dim after 2x (k=3, s=2)
    embed = dict(
        conv1_w=nrm((odim, 1, 3, 3)), conv1_b=nrm((odim,)),
        conv2_w=nrm((odim, odim, 3, 3)), conv2_b=nrm((odim,)),
        lin_w=nrm((odim * f_after, odim)), lin_b=nrm((odim,)),
    )
    layers = []
    for _ in range(num_blocks):
        layers.append(dict(
            norm1_g=jnp.ones((odim,), jnp.float32),
            norm1_b=jnp.zeros((odim,), jnp.float32),
            wq=nrm((odim, odim)), bq=nrm((odim,)),
            wk=nrm((odim, odim)), bk=nrm((odim,)),
            wv=nrm((odim, odim)), bv=nrm((odim,)),
            wo=nrm((odim, odim)), bo=nrm((odim,)),
            norm2_g=jnp.ones((odim,), jnp.float32),
            norm2_b=jnp.zeros((odim,), jnp.float32),
            ff_w1=nrm((odim, linear_units)), ff_b1=nrm((linear_units,)),
            ff_w2=nrm((linear_units, odim)), ff_b2=nrm((odim,)),
        ))
    return dict(embed=embed, layers=layers,
                after_norm_g=jnp.ones((odim,), jnp.float32),
                after_norm_b=jnp.zeros((odim,), jnp.float32))


def prepare_params(p, *, odim, n_head, input_size):
    """One-time (outside jit) weight fusion / cast:
       QKV concat, bf16 weights, 1/sqrt(dk) folded into Q, sqrt(d_model) +
       row permutation folded into the embed linear, (1,N) biases/LN params."""
    dk = odim // n_head
    inv_sqrt_dk = 1.0 / math.sqrt(dk)
    pe_scale = math.sqrt(odim)
    f_after = ((input_size - 1) // 2 - 1) // 2

    e = p["embed"]
    # torch (OC, IC, KH, KW) -> im2col (kh, kw, ic) row order
    conv1_w = jnp.transpose(e["conv1_w"], (2, 3, 1, 0)).reshape(-1, odim)
    conv2_w = jnp.transpose(e["conv2_w"], (2, 3, 1, 0)).reshape(-1, odim)
    # torch feat order is (channel, freq); the kernel-side reshape yields
    # (freq, channel) -> permute lin_w rows and fold the sqrt(d_model) scale.
    lin_w = (e["lin_w"].reshape(odim, f_after, odim)
             .transpose(1, 0, 2).reshape(f_after * odim, odim)) * pe_scale
    embed = dict(
        conv1_w=conv1_w.astype(jnp.bfloat16),
        conv1_b=e["conv1_b"].reshape(1, -1).astype(jnp.float32),
        conv2_w=conv2_w.astype(jnp.bfloat16),
        conv2_b=e["conv2_b"].reshape(1, -1).astype(jnp.float32),
        lin_w=lin_w.astype(jnp.bfloat16),
        lin_b=(e["lin_b"] * pe_scale).reshape(1, -1).astype(jnp.float32),
    )
    layers = []
    for lp in p["layers"]:
        w_qkv = jnp.concatenate(
            [lp["wq"] * inv_sqrt_dk, lp["wk"], lp["wv"]], axis=1)
        b_qkv = jnp.concatenate(
            [lp["bq"] * inv_sqrt_dk, lp["bk"], lp["bv"]])
        layers.append(dict(
            norm1_g=lp["norm1_g"].reshape(1, -1).astype(jnp.float32),
            norm1_b=lp["norm1_b"].reshape(1, -1).astype(jnp.float32),
            w_qkv=w_qkv.astype(jnp.bfloat16),
            b_qkv=b_qkv.reshape(1, -1).astype(jnp.float32),
            wo=lp["wo"].astype(jnp.bfloat16),
            bo=lp["bo"].reshape(1, -1).astype(jnp.float32),
            norm2_g=lp["norm2_g"].reshape(1, -1).astype(jnp.float32),
            norm2_b=lp["norm2_b"].reshape(1, -1).astype(jnp.float32),
            ff_w1=lp["ff_w1"].astype(jnp.bfloat16),
            ff_b1=lp["ff_b1"].reshape(1, -1).astype(jnp.float32),
            ff_w2=lp["ff_w2"].astype(jnp.bfloat16),
            ff_b2=lp["ff_b2"].reshape(1, -1).astype(jnp.float32),
        ))
    return dict(
        embed=embed, layers=layers,
        after_norm_g=p["after_norm_g"].reshape(1, -1).astype(jnp.float32),
        after_norm_b=p["after_norm_b"].reshape(1, -1).astype(jnp.float32))


# ---------------------------------- main -----------------------------------

if __name__ == "__main__":
    key = jax.random.PRNGKey(0)
    k_x, k_p = jax.random.split(key)

    B, T, input_size = 2, 32, 16          # small demo shapes
    odim, n_head, linear_units, num_blocks = 32, 4, 64, 2

    xs = jax.random.normal(k_x, (B, T, input_size), dtype=jnp.float32)
    xs_lens = jnp.array([32, 24], dtype=jnp.int32)
    raw_params = init_params(k_p, input_size, odim, n_head, linear_units,
                             num_blocks)
    params = prepare_params(raw_params, odim=odim, n_head=n_head,
                            input_size=input_size)   # one-time, outside jit

    fwd = jax.jit(functools.partial(base_encoder_forward,
                                    n_head=n_head, odim=odim))
    s_xs, mask_pad, b_xs, mask_pad2, b_layer_out, add_s_layer_out = \
        fwd(xs, xs_lens, params)

    jax.block_until_ready((s_xs, b_xs, mask_pad))
    T2 = ((T - 1) // 2 - 1) // 2
    assert s_xs.shape == (B, T2, odim)
    assert b_xs.shape == (B, T2, odim)
    assert mask_pad.shape == (B, 1, T2)
    assert bool(jnp.all(jnp.isfinite(s_xs))) and bool(jnp.all(jnp.isfinite(b_xs)))
    print("KERNEL_OK")
</pallas_src>

<mosaic_0001>
module attributes {stable_mosaic.version = 11 : i64} {
  func.func @_linear_kernel(%arg0: i32, %arg1: memref<216x9xbf16, #tpu.memory_space<vmem>>, %arg2: memref<9x32xbf16, #tpu.memory_space<vmem>>, %arg3: memref<1x32xf32, #tpu.memory_space<vmem>>, %arg4: memref<216x32xbf16, #tpu.memory_space<vmem>>) attributes {dimension_semantics = [#tpu.dimension_semantics<parallel>], iteration_bounds = array<i64: 1>, scalar_prefetch = 0 : i64, scratch_operands = 0 : i64, tpu.core_type = #tpu.core_type<tc>, window_params = [{transform_indices = @transform_0, window_bounds = array<i64: 216, 9>}, {pipeline_mode = #tpu.pipeline_mode<synchronous>, transform_indices = @transform_1, window_bounds = array<i64: 9, 32>}, {pipeline_mode = #tpu.pipeline_mode<synchronous>, transform_indices = @transform_2, window_bounds = array<i64: 1, 32>}, {transform_indices = @transform_3, window_bounds = array<i64: 216, 32>}]} {
    %c0 = arith.constant 0 : index
    %c0_0 = arith.constant 0 : index
    %0 = vector.load %arg1[%c0, %c0_0] : memref<216x9xbf16, #tpu.memory_space<vmem>>, vector<216x9xbf16>
    %c0_1 = arith.constant 0 : index
    %c0_2 = arith.constant 0 : index
    %1 = vector.load %arg2[%c0_1, %c0_2] : memref<9x32xbf16, #tpu.memory_space<vmem>>, vector<9x32xbf16>
    %cst = arith.constant dense<0.000000e+00> : vector<216x32xf32>
    %2 = tpu.matmul %0, %1, %cst {dimension_numbers = #tpu.dot_dimension_numbers<[1], [0], [0], [1], [0, 0, 1, 1], [], []>} : vector<216x9xbf16>, vector<9x32xbf16>, vector<216x32xf32> -> vector<216x32xf32>
    %c0_3 = arith.constant 0 : index
    %c0_4 = arith.constant 0 : index
    %3 = vector.load %arg3[%c0_3, %c0_4] : memref<1x32xf32, #tpu.memory_space<vmem>>, vector<1x32xf32>
    %4 = vector.broadcast %3 : vector<1x32xf32> to vector<216x32xf32>
    %5 = arith.addf %2, %4 : vector<216x32xf32>
    %cst_5 = arith.constant 0.000000e+00 : f32
    %6 = vector.broadcast %cst_5 : f32 to vector<216x32xf32>
    %7 = arith.maximumf %5, %6 : vector<216x32xf32>
    %8 = arith.truncf %7 : vector<216x32xf32> to vector<216x32xbf16>
    %c0_6 = arith.constant 0 : index
    %c0_7 = arith.constant 0 : index
    %9 = vector.load %arg4[%c0_6, %c0_7] : memref<216x32xbf16, #tpu.memory_space<vmem>>, vector<216x32xbf16>
    tpu.vector_store %arg4[%c0_6, %c0_7], %8 {strides = array<i32>} : memref<216x32xbf16, #tpu.memory_space<vmem>>, vector<216x32xbf16>,
    return
  }
  func.func @transform_0(%arg0: i32) -> (i32, i32) {
    %c0_i32 = arith.constant 0 : i32
    %c0_i32_0 = arith.constant 0 : i32
    return %arg0, %c0_i32 : i32, i32
  }
  func.func @transform_1(%arg0: i32) -> (i32, i32) {
    %c0_i32 = arith.constant 0 : i32
    %c0_i32_0 = arith.constant 0 : i32
    %c0_i32_1 = arith.constant 0 : i32
    return %c0_i32, %c0_i32_0 : i32, i32
  }
  func.func @transform_2(%arg0: i32) -> (i32, i32) {
    %c0_i32 = arith.constant 0 : i32
    %c0_i32_0 = arith.constant 0 : i32
    %c0_i32_1 = arith.constant 0 : i32
    return %c0_i32, %c0_i32_0 : i32, i32
  }
  func.func @transform_3(%arg0: i32) -> (i32, i32) {
    %c0_i32 = arith.constant 0 : i32
    %c0_i32_0 = arith.constant 0 : i32
    return %arg0, %c0_i32 : i32, i32
  }
}

module attributes {stable_mosaic.version = 11 : i64} {
  func.func @_linear_kernel(%arg0: i32, %arg1: memref<48x288xbf16, #tpu.memory_space<vmem>>, %arg2: memref<288x32xbf16, #tpu.memory_space<vmem>>, %arg3: memref<1x32xf32, #tpu.memory_space<vmem>>, %arg4: memref<48x32xbf16, #tpu.memory_space<vmem>>) attributes {dimension_semantics = [#tpu.dimension_semantics<parallel>], iteration_bounds = array<i64: 1>, scalar_prefetch = 0 : i64, scratch_operands = 0 : i64, tpu.core_type = #tpu.core_type<tc>, window_params = [{transform_indices = @transform_0, window_bounds = array<i64: 48, 288>}, {pipeline_mode = #tpu.pipeline_mode<synchronous>, transform_indices = @transform_1, window_bounds = array<i64: 288, 32>}, {pipeline_mode = #tpu.pipeline_mode<synchronous>, transform_indices = @transform_2, window_bounds = array<i64: 1, 32>}, {transform_indices = @transform_3, window_bounds = array<i64: 48, 32>}]} {
    %c0 = arith.constant 0 : index
    %c0_0 = arith.constant 0 : index
    %0 = vector.load %arg1[%c0, %c0_0] : memref<48x288xbf16, #tpu.memory_space<vmem>>, vector<48x288xbf16>
    %c0_1 = arith.constant 0 : index
    %c0_2 = arith.constant 0 : index
    %1 = vector.load %arg2[%c0_1, %c0_2] : memref<288x32xbf16, #tpu.memory_space<vmem>>, vector<288x32xbf16>
    %cst = arith.constant dense<0.000000e+00> : vector<48x32xf32>
    %2 = tpu.matmul %0, %1, %cst {dimension_numbers = #tpu.dot_dimension_numbers<[1], [0], [0], [1], [0, 0, 1, 1], [], []>} : vector<48x288xbf16>, vector<288x32xbf16>, vector<48x32xf32> -> vector<48x32xf32>
    %c0_3 = arith.constant 0 : index
    %c0_4 = arith.constant 0 : index
    %3 = vector.load %arg3[%c0_3, %c0_4] : memref<1x32xf32, #tpu.memory_space<vmem>>, vector<1x32xf32>
    %4 = vector.broadcast %3 : vector<1x32xf32> to vector<48x32xf32>
    %5 = arith.addf %2, %4 : vector<48x32xf32>
    %cst_5 = arith.constant 0.000000e+00 : f32
    %6 = vector.broadcast %cst_5 : f32 to vector<48x32xf32>
    %7 = arith.maximumf %5, %6 : vector<48x32xf32>
    %8 = arith.truncf %7 : vector<48x32xf32> to vector<48x32xbf16>
    %c0_6 = arith.constant 0 : index
    %c0_7 = arith.constant 0 : index
    %9 = vector.load %arg4[%c0_6, %c0_7] : memref<48x32xbf16, #tpu.memory_space<vmem>>, vector<48x32xbf16>
    tpu.vector_store %arg4[%c0_6, %c0_7], %8 {strides = array<i32>} : memref<48x32xbf16, #tpu.memory_space<vmem>>, vector<48x32xbf16>,
    return
  }
  func.func @transform_0(%arg0: i32) -> (i32, i32) {
    %c0_i32 = arith.constant 0 : i32
    %c0_i32_0 = arith.constant 0 : i32
    return %arg0, %c0_i32 : i32, i32
  }
  func.func @transform_1(%arg0: i32) -> (i32, i32) {
    %c0_i32 = arith.constant 0 : i32
    %c0_i32_0 = arith.constant 0 : i32
    %c0_i32_1 = arith.constant 0 : i32
    return %c0_i32, %c0_i32_0 : i32, i32
  }
  func.func @transform_2(%arg0: i32) -> (i32, i32) {
    %c0_i32 = arith.constant 0 : i32
    %c0_i32_0 = arith.constant 0 : i32
    %c0_i32_1 = arith.constant 0 : i32
    return %c0_i32, %c0_i32_0 : i32, i32
  }
  func.func @transform_3(%arg0: i32) -> (i32, i32) {
    %c0_i32 = arith.constant 0 : i32
    %c0_i32_0 = arith.constant 0 : i32
    return %arg0, %c0_i32 : i32, i32
  }
}

module attributes {stable_mosaic.version = 11 : i64} {
  func.func @_linear_kernel(%arg0: i32, %arg1: memref<16x96xbf16, #tpu.memory_space<vmem>>, %arg2: memref<96x32xbf16, #tpu.memory_space<vmem>>, %arg3: memref<1x32xf32, #tpu.memory_space<vmem>>, %arg4: memref<16x32xbf16, #tpu.memory_space<vmem>>, %arg5: memref<16x32xbf16, #tpu.memory_space<vmem>>) attributes {dimension_semantics = [#tpu.dimension_semantics<parallel>], iteration_bounds = array<i64: 1>, scalar_prefetch = 0 : i64, scratch_operands = 0 : i64, tpu.core_type = #tpu.core_type<tc>, window_params = [{transform_indices = @transform_0, window_bounds = array<i64: 16, 96>}, {pipeline_mode = #tpu.pipeline_mode<synchronous>, transform_indices = @transform_1, window_bounds = array<i64: 96, 32>}, {pipeline_mode = #tpu.pipeline_mode<synchronous>, transform_indices = @transform_2, window_bounds = array<i64: 1, 32>}, {transform_indices = @transform_3, window_bounds = array<i64: 16, 32>}, {transform_indices = @transform_4, window_bounds = array<i64: 16, 32>}]} {
    %c0 = arith.constant 0 : index
    %c0_0 = arith.constant 0 : index
    %0 = vector.load %arg1[%c0, %c0_0] : memref<16x96xbf16, #tpu.memory_space<vmem>>, vector<16x96xbf16>
    %c0_1 = arith.constant 0 : index
    %c0_2 = arith.constant 0 : index
    %1 = vector.load %arg2[%c0_1, %c0_2] : memref<96x32xbf16, #tpu.memory_space<vmem>>, vector<96x32xbf16>
    %cst = arith.constant dense<0.000000e+00> : vector<16x32xf32>
    %2 = tpu.matmul %0, %1, %cst {dimension_numbers = #tpu.dot_dimension_numbers<[1], [0], [0], [1], [0, 0, 1, 1], [], []>} : vector<16x96xbf16>, vector<96x32xbf16>, vector<16x32xf32> -> vector<16x32xf32>
    %c0_3 = arith.constant 0 : index
    %c0_4 = arith.constant 0 : index
    %3 = vector.load %arg3[%c0_3, %c0_4] : memref<1x32xf32, #tpu.memory_space<vmem>>, vector<1x32xf32>
    %4 = vector.broadcast %3 : vector<1x32xf32> to vector<16x32xf32>
    %5 = arith.addf %2, %4 : vector<16x32xf32>
    %c0_5 = arith.constant 0 : index
    %c0_6 = arith.constant 0 : index
    %6 = vector.load %arg4[%c0_5, %c0_6] : memref<16x32xbf16, #tpu.memory_space<vmem>>, vector<16x32xbf16>
    %7 = arith.extf %6 : vector<16x32xbf16> to vector<16x32xf32>
    %8 = arith.addf %5, %7 : vector<16x32xf32>
    %9 = arith.truncf %8 : vector<16x32xf32> to vector<16x32xbf16>
    %c0_7 = arith.constant 0 : index
    %c0_8 = arith.constant 0 : index
    %10 = vector.load %arg5[%c0_7, %c0_8] : memref<16x32xbf16, #tpu.memory_space<vmem>>, vector<16x32xbf16>
    tpu.vector_store %arg5[%c0_7, %c0_8], %9 {strides = array<i32>} : memref<16x32xbf16, #tpu.memory_space<vmem>>, vector<16x32xbf16>,
    return
  }
  func.func @transform_0(%arg0: i32) -> (i32, i32) {
    %c0_i32 = arith.constant 0 : i32
    %c0_i32_0 = arith.constant 0 : i32
    return %arg0, %c0_i32 : i32, i32
  }
  func.func @transform_1(%arg0: i32) -> (i32, i32) {
    %c0_i32 = arith.constant 0 : i32
    %c0_i32_0 = arith.constant 0 : i32
    %c0_i32_1 = arith.constant 0 : i32
    return %c0_i32, %c0_i32_0 : i32, i32
  }
  func.func @transform_2(%arg0: i32) -> (i32, i32) {
    %c0_i32 = arith.constant 0 : i32
    %c0_i32_0 = arith.constant 0 : i32
    %c0_i32_1 = arith.constant 0 : i32
    return %c0_i32, %c0_i32_0 : i32, i32
  }
  func.func @transform_3(%arg0: i32) -> (i32, i32) {
    %c0_i32 = arith.constant 0 : i32
    %c0_i32_0 = arith.constant 0 : i32
    return %arg0, %c0_i32 : i32, i32
  }
  func.func @transform_4(%arg0: i32) -> (i32, i32) {
    %c0_i32 = arith.constant 0 : i32
    %c0_i32_0 = arith.constant 0 : i32
    return %arg0, %c0_i32 : i32, i32
  }
}

module attributes {stable_mosaic.version = 11 : i64} {
  func.func @_linear_kernel(%arg0: i32, %arg1: memref<16x32xbf16, #tpu.memory_space<vmem>>, %arg2: memref<1x32xf32, #tpu.memory_space<vmem>>, %arg3: memref<1x32xf32, #tpu.memory_space<vmem>>, %arg4: memref<32x96xbf16, #tpu.memory_space<vmem>>, %arg5: memref<1x96xf32, #tpu.memory_space<vmem>>, %arg6: memref<16x96xbf16, #tpu.memory_space<vmem>>) attributes {dimension_semantics = [#tpu.dimension_semantics<parallel>], iteration_bounds = array<i64: 1>, scalar_prefetch = 0 : i64, scratch_operands = 0 : i64, tpu.core_type = #tpu.core_type<tc>, window_params = [{transform_indices = @transform_0, window_bounds = array<i64: 16, 32>}, {pipeline_mode = #tpu.pipeline_mode<synchronous>, transform_indices = @transform_1, window_bounds = array<i64: 1, 32>}, {pipeline_mode = #tpu.pipeline_mode<synchronous>, transform_indices = @transform_2, window_bounds = array<i64: 1, 32>}, {pipeline_mode = #tpu.pipeline_mode<synchronous>, transform_indices = @transform_3, window_bounds = array<i64: 32, 96>}, {pipeline_mode = #tpu.pipeline_mode<synchronous>, transform_indices = @transform_4, window_bounds = array<i64: 1, 96>}, {transform_indices = @transform_5, window_bounds = array<i64: 16, 96>}]} {
    %c0 = arith.constant 0 : index
    %c0_0 = arith.constant 0 : index
    %0 = vector.load %arg1[%c0, %c0_0] : memref<16x32xbf16, #tpu.memory_space<vmem>>, vector<16x32xbf16>
    %1 = arith.extf %0 : vector<16x32xbf16> to vector<16x32xf32>
    %cst = arith.constant dense<0.000000e+00> : vector<16xf32>
    %2 = vector.multi_reduction <add>, %1, %cst [1] : vector<16x32xf32> to vector<16xf32>
    %3 = vector.shape_cast %2 : vector<16xf32> to vector<16x1xf32>
    %cst_1 = arith.constant 3.200000e+01 : f32
    %4 = vector.broadcast %cst_1 : f32 to vector<16x1xf32>
    %5 = arith.divf %3, %4 : vector<16x1xf32>
    %6 = vector.broadcast %5 : vector<16x1xf32> to vector<16x32xf32>
    %7 = arith.subf %1, %6 : vector<16x32xf32>
    %8 = arith.mulf %7, %7 : vector<16x32xf32>
    %cst_2 = arith.constant dense<0.000000e+00> : vector<16xf32>
    %9 = vector.multi_reduction <add>, %8, %cst_2 [1] : vector<16x32xf32> to vector<16xf32>
    %10 = vector.shape_cast %9 : vector<16xf32> to vector<16x1xf32>
    %cst_3 = arith.constant 3.200000e+01 : f32
    %11 = vector.broadcast %cst_3 : f32 to vector<16x1xf32>
    %12 = arith.divf %10, %11 : vector<16x1xf32>
    %13 = vector.broadcast %5 : vector<16x1xf32> to vector<16x32xf32>
    %14 = arith.subf %1, %13 : vector<16x32xf32>
    %cst_4 = arith.constant 9.99999974E-6 : f32
    %15 = vector.broadcast %cst_4 : f32 to vector<16x1xf32>
    %16 = arith.addf %12, %15 : vector<16x1xf32>
    %17 = math.rsqrt %16 : vector<16x1xf32>
    %18 = vector.broadcast %17 : vector<16x1xf32> to vector<16x32xf32>
    %19 = arith.mulf %14, %18 : vector<16x32xf32>
    %c0_5 = arith.constant 0 : index
    %c0_6 = arith.constant 0 : index
    %20 = vector.load %arg2[%c0_5, %c0_6] : memref<1x32xf32, #tpu.memory_space<vmem>>, vector<1x32xf32>
    %21 = vector.broadcast %20 : vector<1x32xf32> to vector<16x32xf32>
    %22 = arith.mulf %19, %21 : vector<16x32xf32>
    %c0_7 = arith.constant 0 : index
    %c0_8 = arith.constant 0 : index
    %23 = vector.load %arg3[%c0_7, %c0_8] : memref<1x32xf32, #tpu.memory_space<vmem>>, vector<1x32xf32>
    %24 = vector.broadcast %23 : vector<1x32xf32> to vector<16x32xf32>
    %25 = arith.addf %22, %24 : vector<16x32xf32>
    %26 = arith.truncf %25 : vector<16x32xf32> to vector<16x32xbf16>
    %c0_9 = arith.constant 0 : index
    %c0_10 = arith.constant 0 : index
    %27 = vector.load %arg4[%c0_9, %c0_10] : memref<32x96xbf16, #tpu.memory_space<vmem>>, vector<32x96xbf16>
    %cst_11 = arith.constant dense<0.000000e+00> : vector<16x96xf32>
    %28 = tpu.matmul %26, %27, %cst_11 {dimension_numbers = #tpu.dot_dimension_numbers<[1], [0], [0], [1], [0, 0, 1, 1], [], []>} : vector<16x32xbf16>, vector<32x96xbf16>, vector<16x96xf32> -> vector<16x96xf32>
    %c0_12 = arith.constant 0 : index
    %c0_13 = arith.constant 0 : index
    %29 = vector.load %arg5[%c0_12, %c0_13] : memref<1x96xf32, #tpu.memory_space<vmem>>, vector<1x96xf32>
    %30 = vector.broadcast %29 : vector<1x96xf32> to vector<16x96xf32>
    %31 = arith.addf %28, %30 : vector<16x96xf32>
    %32 = arith.truncf %31 : vector<16x96xf32> to vector<16x96xbf16>
    %c0_14 = arith.constant 0 : index
    %c0_15 = arith.constant 0 : index
    %33 = vector.load %arg6[%c0_14, %c0_15] : memref<16x96xbf16, #tpu.memory_space<vmem>>, vector<16x96xbf16>
    tpu.vector_store %arg6[%c0_14, %c0_15], %32 {strides = array<i32>} : memref<16x96xbf16, #tpu.memory_space<vmem>>, vector<16x96xbf16>,
    return
  }
  func.func @transform_0(%arg0: i32) -> (i32, i32) {
    %c0_i32 = arith.constant 0 : i32
    %c0_i32_0 = arith.constant 0 : i32
    return %arg0, %c0_i32 : i32, i32
  }
  func.func @transform_1(%arg0: i32) -> (i32, i32) {
    %c0_i32 = arith.constant 0 : i32
    %c0_i32_0 = arith.constant 0 : i32
    %c0_i32_1 = arith.constant 0 : i32
    return %c0_i32, %c0_i32_0 : i32, i32
  }
  func.func @transform_2(%arg0: i32) -> (i32, i32) {
    %c0_i32 = arith.constant 0 : i32
    %c0_i32_0 = arith.constant 0 : i32
    %c0_i32_1 = arith.constant 0 : i32
    return %c0_i32, %c0_i32_0 : i32, i32
  }
  func.func @transform_3(%arg0: i32) -> (i32, i32) {
    %c0_i32 = arith.constant 0 : i32
    %c0_i32_0 = arith.constant 0 : i32
    %c0_i32_1 = arith.constant 0 : i32
    return %c0_i32, %c0_i32_0 : i32, i32
  }
  func.func @transform_4(%arg0: i32) -> (i32, i32) {
    %c0_i32 = arith.constant 0 : i32
    %c0_i32_0 = arith.constant 0 : i32
    %c0_i32_1 = arith.constant 0 : i32
    return %c0_i32, %c0_i32_0 : i32, i32
  }
  func.func @transform_5(%arg0: i32) -> (i32, i32) {
    %c0_i32 = arith.constant 0 : i32
    %c0_i32_0 = arith.constant 0 : i32
    return %arg0, %c0_i32 : i32, i32
  }
}

module attributes {stable_mosaic.version = 11 : i64} {
  func.func @_linear_kernel(%arg0: i32, %arg1: memref<16x32xbf16, #tpu.memory_space<vmem>>, %arg2: memref<32x32xbf16, #tpu.memory_space<vmem>>, %arg3: memref<1x32xf32, #tpu.memory_space<vmem>>, %arg4: memref<16x32xbf16, #tpu.memory_space<vmem>>, %arg5: memref<16x32xbf16, #tpu.memory_space<vmem>>) attributes {dimension_semantics = [#tpu.dimension_semantics<parallel>], iteration_bounds = array<i64: 1>, scalar_prefetch = 0 : i64, scratch_operands = 0 : i64, tpu.core_type = #tpu.core_type<tc>, window_params = [{transform_indices = @transform_0, window_bounds = array<i64: 16, 32>}, {pipeline_mode = #tpu.pipeline_mode<synchronous>, transform_indices = @transform_1, window_bounds = array<i64: 32, 32>}, {pipeline_mode = #tpu.pipeline_mode<synchronous>, transform_indices = @transform_2, window_bounds = array<i64: 1, 32>}, {transform_indices = @transform_3, window_bounds = array<i64: 16, 32>}, {transform_indices = @transform_4, window_bounds = array<i64: 16, 32>}]} {
    %c0 = arith.constant 0 : index
    %c0_0 = arith.constant 0 : index
    %0 = vector.load %arg1[%c0, %c0_0] : memref<16x32xbf16, #tpu.memory_space<vmem>>, vector<16x32xbf16>
    %c0_1 = arith.constant 0 : index
    %c0_2 = arith.constant 0 : index
    %1 = vector.load %arg2[%c0_1, %c0_2] : memref<32x32xbf16, #tpu.memory_space<vmem>>, vector<32x32xbf16>
    %cst = arith.constant dense<0.000000e+00> : vector<16x32xf32>
    %2 = tpu.matmul %0, %1, %cst {dimension_numbers = #tpu.dot_dimension_numbers<[1], [0], [0], [1], [0, 0, 1, 1], [], []>} : vector<16x32xbf16>, vector<32x32xbf16>, vector<16x32xf32> -> vector<16x32xf32>
    %c0_3 = arith.constant 0 : index
    %c0_4 = arith.constant 0 : index
    %3 = vector.load %arg3[%c0_3, %c0_4] : memref<1x32xf32, #tpu.memory_space<vmem>>, vector<1x32xf32>
    %4 = vector.broadcast %3 : vector<1x32xf32> to vector<16x32xf32>
    %5 = arith.addf %2, %4 : vector<16x32xf32>
    %c0_5 = arith.constant 0 : index
    %c0_6 = arith.constant 0 : index
    %6 = vector.load %arg4[%c0_5, %c0_6] : memref<16x32xbf16, #tpu.memory_space<vmem>>, vector<16x32xbf16>
    %7 = arith.extf %6 : vector<16x32xbf16> to vector<16x32xf32>
    %8 = arith.addf %5, %7 : vector<16x32xf32>
    %9 = arith.truncf %8 : vector<16x32xf32> to vector<16x32xbf16>
    %c0_7 = arith.constant 0 : index
    %c0_8 = arith.constant 0 : index
    %10 = vector.load %arg5[%c0_7, %c0_8] : memref<16x32xbf16, #tpu.memory_space<vmem>>, vector<16x32xbf16>
    tpu.vector_store %arg5[%c0_7, %c0_8], %9 {strides = array<i32>} : memref<16x32xbf16, #tpu.memory_space<vmem>>, vector<16x32xbf16>,
    return
  }
  func.func @transform_0(%arg0: i32) -> (i32, i32) {
    %c0_i32 = arith.constant 0 : i32
    %c0_i32_0 = arith.constant 0 : i32
    return %arg0, %c0_i32 : i32, i32
  }
  func.func @transform_1(%arg0: i32) -> (i32, i32) {
    %c0_i32 = arith.constant 0 : i32
    %c0_i32_0 = arith.constant 0 : i32
    %c0_i32_1 = arith.constant 0 : i32
    return %c0_i32, %c0_i32_0 : i32, i32
  }
  func.func @transform_2(%arg0: i32) -> (i32, i32) {
    %c0_i32 = arith.constant 0 : i32
    %c0_i32_0 = arith.constant 0 : i32
    %c0_i32_1 = arith.constant 0 : i32
    return %c0_i32, %c0_i32_0 : i32, i32
  }
  func.func @transform_3(%arg0: i32) -> (i32, i32) {
    %c0_i32 = arith.constant 0 : i32
    %c0_i32_0 = arith.constant 0 : i32
    return %arg0, %c0_i32 : i32, i32
  }
  func.func @transform_4(%arg0: i32) -> (i32, i32) {
    %c0_i32 = arith.constant 0 : i32
    %c0_i32_0 = arith.constant 0 : i32
    return %arg0, %c0_i32 : i32, i32
  }
}

module attributes {stable_mosaic.version = 11 : i64} {
  func.func @_attention_kernel(%arg0: i32, %arg1: memref<1x8x96xbf16, #tpu.memory_space<vmem>>, %arg2: memref<1x1x8xf32, #tpu.memory_space<vmem>>, %arg3: memref<1x8x32xbf16, #tpu.memory_space<vmem>>) attributes {dimension_semantics = [#tpu.dimension_semantics<parallel>], iteration_bounds = array<i64: 2>, scalar_prefetch = 0 : i64, scratch_operands = 0 : i64, tpu.core_type = #tpu.core_type<tc>, window_params = [{transform_indices = @transform_0, window_bounds = array<i64: 1, 8, 96>}, {transform_indices = @transform_1, window_bounds = array<i64: 1, 1, 8>}, {transform_indices = @transform_2, window_bounds = array<i64: 1, 8, 32>}]} {
    %c0 = arith.constant 0 : index
    %c0_0 = arith.constant 0 : index
    %c0_1 = arith.constant 0 : index
    %0 = vector.load %arg1[%c0, %c0_0, %c0_1] : memref<1x8x96xbf16, #tpu.memory_space<vmem>>, vector<1x8x96xbf16>
    %1 = vector.shape_cast %0 : vector<1x8x96xbf16> to vector<8x96xbf16>
    %c0_2 = arith.constant 0 : index
    %c0_3 = arith.constant 0 : index
    %c0_4 = arith.constant 0 : index
    %2 = vector.load %arg2[%c0_2, %c0_3, %c0_4] : memref<1x1x8xf32, #tpu.memory_space<vmem>>, vector<1x1x8xf32>
    %3 = vector.shape_cast %2 : vector<1x1x8xf32> to vector<1x8xf32>
    %cst = arith.constant 1.000000e+00 : f32
    %4 = vector.broadcast %cst : f32 to vector<1x8xf32>
    %5 = arith.subf %4, %3 : vector<1x8xf32>
    %cst_5 = arith.constant -1.000000e+30 : f32
    %6 = vector.broadcast %cst_5 : f32 to vector<1x8xf32>
    %7 = arith.mulf %5, %6 : vector<1x8xf32>
    %8 = vector.extract_strided_slice %1 {offsets = [0, 0], sizes = [8, 8], strides = [1, 1]} : vector<8x96xbf16> to vector<8x8xbf16>
    %9 = vector.extract_strided_slice %1 {offsets = [0, 32], sizes = [8, 8], strides = [1, 1]} : vector<8x96xbf16> to vector<8x8xbf16>
    %10 = vector.extract_strided_slice %1 {offsets = [0, 64], sizes = [8, 8], strides = [1, 1]} : vector<8x96xbf16> to vector<8x8xbf16>
    %cst_6 = arith.constant dense<0.000000e+00> : vector<8x8xf32>
    %11 = tpu.matmul %8, %9, %cst_6 {dimension_numbers = #tpu.dot_dimension_numbers<[1], [1], [0], [0], [0, 0, 1, 0], [], []>} : vector<8x8xbf16>, vector<8x8xbf16>, vector<8x8xf32> -> vector<8x8xf32>
    %12 = vector.broadcast %7 : vector<1x8xf32> to vector<8x8xf32>
    %13 = arith.addf %11, %12 : vector<8x8xf32>
    %cst_7 = arith.constant dense<0xFF800000> : vector<8xf32>
    %14 = vector.multi_reduction <maximumf>, %13, %cst_7 [1] : vector<8x8xf32> to vector<8xf32>
    %15 = vector.shape_cast %14 : vector<8xf32> to vector<8x1xf32>
    %16 = vector.broadcast %15 : vector<8x1xf32> to vector<8x8xf32>
    %17 = arith.subf %13, %16 : vector<8x8xf32>
    %18 = math.exp %17 : vector<8x8xf32>
    %cst_8 = arith.constant dense<0.000000e+00> : vector<8xf32>
    %19 = vector.multi_reduction <add>, %18, %cst_8 [1] : vector<8x8xf32> to vector<8xf32>
    %20 = vector.shape_cast %19 : vector<8xf32> to vector<8x1xf32>
    %21 = tpu.reciprocal %20 {approx = true} : vector<8x1xf32> -> vector<8x1xf32>
    %22 = vector.broadcast %21 : vector<8x1xf32> to vector<8x8xf32>
    %23 = arith.mulf %18, %22 : vector<8x8xf32>
    %24 = arith.truncf %23 : vector<8x8xf32> to vector<8x8xbf16>
    %cst_9 = arith.constant dense<0.000000e+00> : vector<8x8xf32>
    %25 = tpu.matmul %24, %10, %cst_9 {dimension_numbers = #tpu.dot_dimension_numbers<[1], [0], [0], [1], [0, 0, 1, 1], [], []>} : vector<8x8xbf16>, vector<8x8xbf16>, vector<8x8xf32> -> vector<8x8xf32>
    %26 = arith.truncf %25 : vector<8x8xf32> to vector<8x8xbf16>
    %c0_10 = arith.constant 0 : index
    %c0_11 = arith.constant 0 : index
    %c0_12 = arith.constant 0 : index
    %27 = vector.load %arg3[%c0_10, %c0_11, %c0_12] : memref<1x8x32xbf16, #tpu.memory_space<vmem>>, vector<1x8x8xbf16>
    %28 = vector.shape_cast %27 : vector<1x8x8xbf16> to vector<8x8xbf16>
    %29 = vector.shape_cast %26 : vector<8x8xbf16> to vector<1x8x8xbf16>
    tpu.vector_store %arg3[%c0_10, %c0_11, %c0_12], %29 {strides = array<i32>} : memref<1x8x32xbf16, #tpu.memory_space<vmem>>, vector<1x8x8xbf16>,
    %30 = vector.extract_strided_slice %1 {offsets = [0, 8], sizes = [8, 8], strides = [1, 1]} : vector<8x96xbf16> to vector<8x8xbf16>
    %31 = vector.extract_strided_slice %1 {offsets = [0, 40], sizes = [8, 8], strides = [1, 1]} : vector<8x96xbf16> to vector<8x8xbf16>
    %32 = vector.extract_strided_slice %1 {offsets = [0, 72], sizes = [8, 8], strides = [1, 1]} : vector<8x96xbf16> to vector<8x8xbf16>
    %cst_13 = arith.constant dense<0.000000e+00> : vector<8x8xf32>
    %33 = tpu.matmul %30, %31, %cst_13 {dimension_numbers = #tpu.dot_dimension_numbers<[1], [1], [0], [0], [0, 0, 1, 0], [], []>} : vector<8x8xbf16>, vector<8x8xbf16>, vector<8x8xf32> -> vector<8x8xf32>
    %34 = vector.broadcast %7 : vector<1x8xf32> to vector<8x8xf32>
    %35 = arith.addf %33, %34 : vector<8x8xf32>
    %cst_14 = arith.constant dense<0xFF800000> : vector<8xf32>
    %36 = vector.multi_reduction <maximumf>, %35, %cst_14 [1] : vector<8x8xf32> to vector<8xf32>
    %37 = vector.shape_cast %36 : vector<8xf32> to vector<8x1xf32>
    %38 = vector.broadcast %37 : vector<8x1xf32> to vector<8x8xf32>
    %39 = arith.subf %35, %38 : vector<8x8xf32>
    %40 = math.exp %39 : vector<8x8xf32>
    %cst_15 = arith.constant dense<0.000000e+00> : vector<8xf32>
    %41 = vector.multi_reduction <add>, %40, %cst_15 [1] : vector<8x8xf32> to vector<8xf32>
    %42 = vector.shape_cast %41 : vector<8xf32> to vector<8x1xf32>
    %43 = tpu.reciprocal %42 {approx = true} : vector<8x1xf32> -> vector<8x1xf32>
    %44 = vector.broadcast %43 : vector<8x1xf32> to vector<8x8xf32>
    %45 = arith.mulf %40, %44 : vector<8x8xf32>
    %46 = arith.truncf %45 : vector<8x8xf32> to vector<8x8xbf16>
    %cst_16 = arith.constant dense<0.000000e+00> : vector<8x8xf32>
    %47 = tpu.matmul %46, %32, %cst_16 {dimension_numbers = #tpu.dot_dimension_numbers<[1], [0], [0], [1], [0, 0, 1, 1], [], []>} : vector<8x8xbf16>, vector<8x8xbf16>, vector<8x8xf32> -> vector<8x8xf32>
    %48 = arith.truncf %47 : vector<8x8xf32> to vector<8x8xbf16>
    %c0_17 = arith.constant 0 : index
    %c0_18 = arith.constant 0 : index
    %c8 = arith.constant 8 : index
    %49 = vector.load %arg3[%c0_17, %c0_18, %c8] : memref<1x8x32xbf16, #tpu.memory_space<vmem>>, vector<1x8x8xbf16>
    %50 = vector.shape_cast %49 : vector<1x8x8xbf16> to vector<8x8xbf16>
    %51 = vector.shape_cast %48 : vector<8x8xbf16> to vector<1x8x8xbf16>
    tpu.vector_store %arg3[%c0_17, %c0_18, %c8], %51 {strides = array<i32>} : memref<1x8x32xbf16, #tpu.memory_space<vmem>>, vector<1x8x8xbf16>,
    %52 = vector.extract_strided_slice %1 {offsets = [0, 16], sizes = [8, 8], strides = [1, 1]} : vector<8x96xbf16> to vector<8x8xbf16>
    %53 = vector.extract_strided_slice %1 {offsets = [0, 48], sizes = [8, 8], strides = [1, 1]} : vector<8x96xbf16> to vector<8x8xbf16>
    %54 = vector.extract_strided_slice %1 {offsets = [0, 80], sizes = [8, 8], strides = [1, 1]} : vector<8x96xbf16> to vector<8x8xbf16>
    %cst_19 = arith.constant dense<0.000000e+00> : vector<8x8xf32>
    %55 = tpu.matmul %52, %53, %cst_19 {dimension_numbers = #tpu.dot_dimension_numbers<[1], [1], [0], [0], [0, 0, 1, 0], [], []>} : vector<8x8xbf16>, vector<8x8xbf16>, vector<8x8xf32> -> vector<8x8xf32>
    %56 = vector.broadcast %7 : vector<1x8xf32> to vector<8x8xf32>
    %57 = arith.addf %55, %56 : vector<8x8xf32>
    %cst_20 = arith.constant dense<0xFF800000> : vector<8xf32>
    %58 = vector.multi_reduction <maximumf>, %57, %cst_20 [1] : vector<8x8xf32> to vector<8xf32>
    %59 = vector.shape_cast %58 : vector<8xf32> to vector<8x1xf32>
    %60 = vector.broadcast %59 : vector<8x1xf32> to vector<8x8xf32>
    %61 = arith.subf %57, %60 : vector<8x8xf32>
    %62 = math.exp %61 : vector<8x8xf32>
    %cst_21 = arith.constant dense<0.000000e+00> : vector<8xf32>
    %63 = vector.multi_reduction <add>, %62, %cst_21 [1] : vector<8x8xf32> to vector<8xf32>
    %64 = vector.shape_cast %63 : vector<8xf32> to vector<8x1xf32>
    %65 = tpu.reciprocal %64 {approx = true} : vector<8x1xf32> -> vector<8x1xf32>
    %66 = vector.broadcast %65 : vector<8x1xf32> to vector<8x8xf32>
    %67 = arith.mulf %62, %66 : vector<8x8xf32>
    %68 = arith.truncf %67 : vector<8x8xf32> to vector<8x8xbf16>
    %cst_22 = arith.constant dense<0.000000e+00> : vector<8x8xf32>
    %69 = tpu.matmul %68, %54, %cst_22 {dimension_numbers = #tpu.dot_dimension_numbers<[1], [0], [0], [1], [0, 0, 1, 1], [], []>} : vector<8x8xbf16>, vector<8x8xbf16>, vector<8x8xf32> -> vector<8x8xf32>
    %70 = arith.truncf %69 : vector<8x8xf32> to vector<8x8xbf16>
    %c0_23 = arith.constant 0 : index
    %c0_24 = arith.constant 0 : index
    %c16 = arith.constant 16 : index
    %71 = vector.load %arg3[%c0_23, %c0_24, %c16] : memref<1x8x32xbf16, #tpu.memory_space<vmem>>, vector<1x8x8xbf16>
    %72 = vector.shape_cast %71 : vector<1x8x8xbf16> to vector<8x8xbf16>
    %73 = vector.shape_cast %70 : vector<8x8xbf16> to vector<1x8x8xbf16>
    tpu.vector_store %arg3[%c0_23, %c0_24, %c16], %73 {strides = array<i32>} : memref<1x8x32xbf16, #tpu.memory_space<vmem>>, vector<1x8x8xbf16>,
    %74 = vector.extract_strided_slice %1 {offsets = [0, 24], sizes = [8, 8], strides = [1, 1]} : vector<8x96xbf16> to vector<8x8xbf16>
    %75 = vector.extract_strided_slice %1 {offsets = [0, 56], sizes = [8, 8], strides = [1, 1]} : vector<8x96xbf16> to vector<8x8xbf16>
    %76 = vector.extract_strided_slice %1 {offsets = [0, 88], sizes = [8, 8], strides = [1, 1]} : vector<8x96xbf16> to vector<8x8xbf16>
    %cst_25 = arith.constant dense<0.000000e+00> : vector<8x8xf32>
    %77 = tpu.matmul %74, %75, %cst_25 {dimension_numbers = #tpu.dot_dimension_numbers<[1], [1], [0], [0], [0, 0, 1, 0], [], []>} : vector<8x8xbf16>, vector<8x8xbf16>, vector<8x8xf32> -> vector<8x8xf32>
    %78 = vector.broadcast %7 : vector<1x8xf32> to vector<8x8xf32>
    %79 = arith.addf %77, %78 : vector<8x8xf32>
    %cst_26 = arith.constant dense<0xFF800000> : vector<8xf32>
    %80 = vector.multi_reduction <maximumf>, %79, %cst_26 [1] : vector<8x8xf32> to vector<8xf32>
    %81 = vector.shape_cast %80 : vector<8xf32> to vector<8x1xf32>
    %82 = vector.broadcast %81 : vector<8x1xf32> to vector<8x8xf32>
    %83 = arith.subf %79, %82 : vector<8x8xf32>
    %84 = math.exp %83 : vector<8x8xf32>
    %cst_27 = arith.constant dense<0.000000e+00> : vector<8xf32>
    %85 = vector.multi_reduction <add>, %84, %cst_27 [1] : vector<8x8xf32> to vector<8xf32>
    %86 = vector.shape_cast %85 : vector<8xf32> to vector<8x1xf32>
    %87 = tpu.reciprocal %86 {approx = true} : vector<8x1xf32> -> vector<8x1xf32>
    %88 = vector.broadcast %87 : vector<8x1xf32> to vector<8x8xf32>
    %89 = arith.mulf %84, %88 : vector<8x8xf32>
    %90 = arith.truncf %89 : vector<8x8xf32> to vector<8x8xbf16>
    %cst_28 = arith.constant dense<0.000000e+00> : vector<8x8xf32>
    %91 = tpu.matmul %90, %76, %cst_28 {dimension_numbers = #tpu.dot_dimension_numbers<[1], [0], [0], [1], [0, 0, 1, 1], [], []>} : vector<8x8xbf16>, vector<8x8xbf16>, vector<8x8xf32> -> vector<8x8xf32>
    %92 = arith.truncf %91 : vector<8x8xf32> to vector<8x8xbf16>
    %c0_29 = arith.constant 0 : index
    %c0_30 = arith.constant 0 : index
    %c24 = arith.constant 24 : index
    %93 = vector.load %arg3[%c0_29, %c0_30, %c24] : memref<1x8x32xbf16, #tpu.memory_space<vmem>>, vector<1x8x8xbf16>
    %94 = vector.shape_cast %93 : vector<1x8x8xbf16> to vector<8x8xbf16>
    %95 = vector.shape_cast %92 : vector<8x8xbf16> to vector<1x8x8xbf16>
    tpu.vector_store %arg3[%c0_29, %c0_30, %c24], %95 {strides = array<i32>} : memref<1x8x32xbf16, #tpu.memory_space<vmem>>, vector<1x8x8xbf16>,
    return
  }
  func.func @transform_0(%arg0: i32) -> (i32, i32, i32) {
    %c0_i32 = arith.constant 0 : i32
    %c0_i32_0 = arith.constant 0 : i32
    %c0_i32_1 = arith.constant 0 : i32
    return %arg0, %c0_i32, %c0_i32_0 : i32, i32, i32
  }
  func.func @transform_1(%arg0: i32) -> (i32, i32, i32) {
    %c0_i32 = arith.constant 0 : i32
    %c0_i32_0 = arith.constant 0 : i32
    %c0_i32_1 = arith.constant 0 : i32
    return %arg0, %c0_i32, %c0_i32_0 : i32, i32, i32
  }
  func.func @transform_2(%arg0: i32) -> (i32, i32, i32) {
    %c0_i32 = arith.constant 0 : i32
    %c0_i32_0 = arith.constant 0 : i32
    %c0_i32_1 = arith.constant 0 : i32
    return %arg0, %c0_i32, %c0_i32_0 : i32, i32, i32
  }
}

module attributes {stable_mosaic.version = 11 : i64} {
  func.func @_linear_kernel(%arg0: i32, %arg1: memref<16x32xbf16, #tpu.memory_space<vmem>>, %arg2: memref<1x32xf32, #tpu.memory_space<vmem>>, %arg3: memref<1x32xf32, #tpu.memory_space<vmem>>, %arg4: memref<32x64xbf16, #tpu.memory_space<vmem>>, %arg5: memref<1x64xf32, #tpu.memory_space<vmem>>, %arg6: memref<16x64xbf16, #tpu.memory_space<vmem>>) attributes {dimension_semantics = [#tpu.dimension_semantics<parallel>], iteration_bounds = array<i64: 1>, scalar_prefetch = 0 : i64, scratch_operands = 0 : i64, tpu.core_type = #tpu.core_type<tc>, window_params = [{transform_indices = @transform_0, window_bounds = array<i64: 16, 32>}, {pipeline_mode = #tpu.pipeline_mode<synchronous>, transform_indices = @transform_1, window_bounds = array<i64: 1, 32>}, {pipeline_mode = #tpu.pipeline_mode<synchronous>, transform_indices = @transform_2, window_bounds = array<i64: 1, 32>}, {pipeline_mode = #tpu.pipeline_mode<synchronous>, transform_indices = @transform_3, window_bounds = array<i64: 32, 64>}, {pipeline_mode = #tpu.pipeline_mode<synchronous>, transform_indices = @transform_4, window_bounds = array<i64: 1, 64>}, {transform_indices = @transform_5, window_bounds = array<i64: 16, 64>}]} {
    %c0 = arith.constant 0 : index
    %c0_0 = arith.constant 0 : index
    %0 = vector.load %arg1[%c0, %c0_0] : memref<16x32xbf16, #tpu.memory_space<vmem>>, vector<16x32xbf16>
    %1 = arith.extf %0 : vector<16x32xbf16> to vector<16x32xf32>
    %cst = arith.constant dense<0.000000e+00> : vector<16xf32>
    %2 = vector.multi_reduction <add>, %1, %cst [1] : vector<16x32xf32> to vector<16xf32>
    %3 = vector.shape_cast %2 : vector<16xf32> to vector<16x1xf32>
    %cst_1 = arith.constant 3.200000e+01 : f32
    %4 = vector.broadcast %cst_1 : f32 to vector<16x1xf32>
    %5 = arith.divf %3, %4 : vector<16x1xf32>
    %6 = vector.broadcast %5 : vector<16x1xf32> to vector<16x32xf32>
    %7 = arith.subf %1, %6 : vector<16x32xf32>
    %8 = arith.mulf %7, %7 : vector<16x32xf32>
    %cst_2 = arith.constant dense<0.000000e+00> : vector<16xf32>
    %9 = vector.multi_reduction <add>, %8, %cst_2 [1] : vector<16x32xf32> to vector<16xf32>
    %10 = vector.shape_cast %9 : vector<16xf32> to vector<16x1xf32>
    %cst_3 = arith.constant 3.200000e+01 : f32
    %11 = vector.broadcast %cst_3 : f32 to vector<16x1xf32>
    %12 = arith.divf %10, %11 : vector<16x1xf32>
    %13 = vector.broadcast %5 : vector<16x1xf32> to vector<16x32xf32>
    %14 = arith.subf %1, %13 : vector<16x32xf32>
    %cst_4 = arith.constant 9.99999974E-6 : f32
    %15 = vector.broadcast %cst_4 : f32 to vector<16x1xf32>
    %16 = arith.addf %12, %15 : vector<16x1xf32>
    %17 = math.rsqrt %16 : vector<16x1xf32>
    %18 = vector.broadcast %17 : vector<16x1xf32> to vector<16x32xf32>
    %19 = arith.mulf %14, %18 : vector<16x32xf32>
    %c0_5 = arith.constant 0 : index
    %c0_6 = arith.constant 0 : index
    %20 = vector.load %arg2[%c0_5, %c0_6] : memref<1x32xf32, #tpu.memory_space<vmem>>, vector<1x32xf32>
    %21 = vector.broadcast %20 : vector<1x32xf32> to vector<16x32xf32>
    %22 = arith.mulf %19, %21 : vector<16x32xf32>
    %c0_7 = arith.constant 0 : index
    %c0_8 = arith.constant 0 : index
    %23 = vector.load %arg3[%c0_7, %c0_8] : memref<1x32xf32, #tpu.memory_space<vmem>>, vector<1x32xf32>
    %24 = vector.broadcast %23 : vector<1x32xf32> to vector<16x32xf32>
    %25 = arith.addf %22, %24 : vector<16x32xf32>
    %26 = arith.truncf %25 : vector<16x32xf32> to vector<16x32xbf16>
    %c0_9 = arith.constant 0 : index
    %c0_10 = arith.constant 0 : index
    %27 = vector.load %arg4[%c0_9, %c0_10] : memref<32x64xbf16, #tpu.memory_space<vmem>>, vector<32x64xbf16>
    %cst_11 = arith.constant dense<0.000000e+00> : vector<16x64xf32>
    %28 = tpu.matmul %26, %27, %cst_11 {dimension_numbers = #tpu.dot_dimension_numbers<[1], [0], [0], [1], [0, 0, 1, 1], [], []>} : vector<16x32xbf16>, vector<32x64xbf16>, vector<16x64xf32> -> vector<16x64xf32>
    %c0_12 = arith.constant 0 : index
    %c0_13 = arith.constant 0 : index
    %29 = vector.load %arg5[%c0_12, %c0_13] : memref<1x64xf32, #tpu.memory_space<vmem>>, vector<1x64xf32>
    %30 = vector.broadcast %29 : vector<1x64xf32> to vector<16x64xf32>
    %31 = arith.addf %28, %30 : vector<16x64xf32>
    %cst_14 = arith.constant 0.000000e+00 : f32
    %32 = vector.broadcast %cst_14 : f32 to vector<16x64xf32>
    %33 = arith.maximumf %31, %32 : vector<16x64xf32>
    %34 = arith.truncf %33 : vector<16x64xf32> to vector<16x64xbf16>
    %c0_15 = arith.constant 0 : index
    %c0_16 = arith.constant 0 : index
    %35 = vector.load %arg6[%c0_15, %c0_16] : memref<16x64xbf16, #tpu.memory_space<vmem>>, vector<16x64xbf16>
    tpu.vector_store %arg6[%c0_15, %c0_16], %34 {strides = array<i32>} : memref<16x64xbf16, #tpu.memory_space<vmem>>, vector<16x64xbf16>,
    return
  }
  func.func @transform_0(%arg0: i32) -> (i32, i32) {
    %c0_i32 = arith.constant 0 : i32
    %c0_i32_0 = arith.constant 0 : i32
    return %arg0, %c0_i32 : i32, i32
  }
  func.func @transform_1(%arg0: i32) -> (i32, i32) {
    %c0_i32 = arith.constant 0 : i32
    %c0_i32_0 = arith.constant 0 : i32
    %c0_i32_1 = arith.constant 0 : i32
    return %c0_i32, %c0_i32_0 : i32, i32
  }
  func.func @transform_2(%arg0: i32) -> (i32, i32) {
    %c0_i32 = arith.constant 0 : i32
    %c0_i32_0 = arith.constant 0 : i32
    %c0_i32_1 = arith.constant 0 : i32
    return %c0_i32, %c0_i32_0 : i32, i32
  }
  func.func @transform_3(%arg0: i32) -> (i32, i32) {
    %c0_i32 = arith.constant 0 : i32
    %c0_i32_0 = arith.constant 0 : i32
    %c0_i32_1 = arith.constant 0 : i32
    return %c0_i32, %c0_i32_0 : i32, i32
  }
  func.func @transform_4(%arg0: i32) -> (i32, i32) {
    %c0_i32 = arith.constant 0 : i32
    %c0_i32_0 = arith.constant 0 : i32
    %c0_i32_1 = arith.constant 0 : i32
    return %c0_i32, %c0_i32_0 : i32, i32
  }
  func.func @transform_5(%arg0: i32) -> (i32, i32) {
    %c0_i32 = arith.constant 0 : i32
    %c0_i32_0 = arith.constant 0 : i32
    return %arg0, %c0_i32 : i32, i32
  }
}

module attributes {stable_mosaic.version = 11 : i64} {
  func.func @_linear_kernel(%arg0: i32, %arg1: memref<16x64xbf16, #tpu.memory_space<vmem>>, %arg2: memref<64x32xbf16, #tpu.memory_space<vmem>>, %arg3: memref<1x32xf32, #tpu.memory_space<vmem>>, %arg4: memref<16x32xbf16, #tpu.memory_space<vmem>>, %arg5: memref<16x32xbf16, #tpu.memory_space<vmem>>) attributes {dimension_semantics = [#tpu.dimension_semantics<parallel>], iteration_bounds = array<i64: 1>, scalar_prefetch = 0 : i64, scratch_operands = 0 : i64, tpu.core_type = #tpu.core_type<tc>, window_params = [{transform_indices = @transform_0, window_bounds = array<i64: 16, 64>}, {pipeline_mode = #tpu.pipeline_mode<synchronous>, transform_indices = @transform_1, window_bounds = array<i64: 64, 32>}, {pipeline_mode = #tpu.pipeline_mode<synchronous>, transform_indices = @transform_2, window_bounds = array<i64: 1, 32>}, {transform_indices = @transform_3, window_bounds = array<i64: 16, 32>}, {transform_indices = @transform_4, window_bounds = array<i64: 16, 32>}]} {
    %c0 = arith.constant 0 : index
    %c0_0 = arith.constant 0 : index
    %0 = vector.load %arg1[%c0, %c0_0] : memref<16x64xbf16, #tpu.memory_space<vmem>>, vector<16x64xbf16>
    %c0_1 = arith.constant 0 : index
    %c0_2 = arith.constant 0 : index
    %1 = vector.load %arg2[%c0_1, %c0_2] : memref<64x32xbf16, #tpu.memory_space<vmem>>, vector<64x32xbf16>
    %cst = arith.constant dense<0.000000e+00> : vector<16x32xf32>
    %2 = tpu.matmul %0, %1, %cst {dimension_numbers = #tpu.dot_dimension_numbers<[1], [0], [0], [1], [0, 0, 1, 1], [], []>} : vector<16x64xbf16>, vector<64x32xbf16>, vector<16x32xf32> -> vector<16x32xf32>
    %c0_3 = arith.constant 0 : index
    %c0_4 = arith.constant 0 : index
    %3 = vector.load %arg3[%c0_3, %c0_4] : memref<1x32xf32, #tpu.memory_space<vmem>>, vector<1x32xf32>
    %4 = vector.broadcast %3 : vector<1x32xf32> to vector<16x32xf32>
    %5 = arith.addf %2, %4 : vector<16x32xf32>
    %c0_5 = arith.constant 0 : index
    %c0_6 = arith.constant 0 : index
    %6 = vector.load %arg4[%c0_5, %c0_6] : memref<16x32xbf16, #tpu.memory_space<vmem>>, vector<16x32xbf16>
    %7 = arith.extf %6 : vector<16x32xbf16> to vector<16x32xf32>
    %8 = arith.addf %5, %7 : vector<16x32xf32>
    %9 = arith.truncf %8 : vector<16x32xf32> to vector<16x32xbf16>
    %c0_7 = arith.constant 0 : index
    %c0_8 = arith.constant 0 : index
    %10 = vector.load %arg5[%c0_7, %c0_8] : memref<16x32xbf16, #tpu.memory_space<vmem>>, vector<16x32xbf16>
    tpu.vector_store %arg5[%c0_7, %c0_8], %9 {strides = array<i32>} : memref<16x32xbf16, #tpu.memory_space<vmem>>, vector<16x32xbf16>,
    return
  }
  func.func @transform_0(%arg0: i32) -> (i32, i32) {
    %c0_i32 = arith.constant 0 : i32
    %c0_i32_0 = arith.constant 0 : i32
    return %arg0, %c0_i32 : i32, i32
  }
  func.func @transform_1(%arg0: i32) -> (i32, i32) {
    %c0_i32 = arith.constant 0 : i32
    %c0_i32_0 = arith.constant 0 : i32
    %c0_i32_1 = arith.constant 0 : i32
    return %c0_i32, %c0_i32_0 : i32, i32
  }
  func.func @transform_2(%arg0: i32) -> (i32, i32) {
    %c0_i32 = arith.constant 0 : i32
    %c0_i32_0 = arith.constant 0 : i32
    %c0_i32_1 = arith.constant 0 : i32
    return %c0_i32, %c0_i32_0 : i32, i32
  }
  func.func @transform_3(%arg0: i32) -> (i32, i32) {
    %c0_i32 = arith.constant 0 : i32
    %c0_i32_0 = arith.constant 0 : i32
    return %arg0, %c0_i32 : i32, i32
  }
  func.func @transform_4(%arg0: i32) -> (i32, i32) {
    %c0_i32 = arith.constant 0 : i32
    %c0_i32_0 = arith.constant 0 : i32
    return %arg0, %c0_i32 : i32, i32
  }
}

module attributes {stable_mosaic.version = 11 : i64} {
  func.func @_layernorm_kernel(%arg0: i32, %arg1: memref<16x32xbf16, #tpu.memory_space<vmem>>, %arg2: memref<1x32xf32, #tpu.memory_space<vmem>>, %arg3: memref<1x32xf32, #tpu.memory_space<vmem>>, %arg4: memref<16x32xf32, #tpu.memory_space<vmem>>) attributes {dimension_semantics = [#tpu.dimension_semantics<parallel>], iteration_bounds = array<i64: 1>, scalar_prefetch = 0 : i64, scratch_operands = 0 : i64, tpu.core_type = #tpu.core_type<tc>, window_params = [{transform_indices = @transform_0, window_bounds = array<i64: 16, 32>}, {pipeline_mode = #tpu.pipeline_mode<synchronous>, transform_indices = @transform_1, window_bounds = array<i64: 1, 32>}, {pipeline_mode = #tpu.pipeline_mode<synchronous>, transform_indices = @transform_2, window_bounds = array<i64: 1, 32>}, {transform_indices = @transform_3, window_bounds = array<i64: 16, 32>}]} {
    %c0 = arith.constant 0 : index
    %c0_0 = arith.constant 0 : index
    %0 = vector.load %arg1[%c0, %c0_0] : memref<16x32xbf16, #tpu.memory_space<vmem>>, vector<16x32xbf16>
    %1 = arith.extf %0 : vector<16x32xbf16> to vector<16x32xf32>
    %cst = arith.constant dense<0.000000e+00> : vector<16xf32>
    %2 = vector.multi_reduction <add>, %1, %cst [1] : vector<16x32xf32> to vector<16xf32>
    %3 = vector.shape_cast %2 : vector<16xf32> to vector<16x1xf32>
    %cst_1 = arith.constant 3.200000e+01 : f32
    %4 = vector.broadcast %cst_1 : f32 to vector<16x1xf32>
    %5 = arith.divf %3, %4 : vector<16x1xf32>
    %6 = vector.broadcast %5 : vector<16x1xf32> to vector<16x32xf32>
    %7 = arith.subf %1, %6 : vector<16x32xf32>
    %8 = arith.mulf %7, %7 : vector<16x32xf32>
    %cst_2 = arith.constant dense<0.000000e+00> : vector<16xf32>
    %9 = vector.multi_reduction <add>, %8, %cst_2 [1] : vector<16x32xf32> to vector<16xf32>
    %10 = vector.shape_cast %9 : vector<16xf32> to vector<16x1xf32>
    %cst_3 = arith.constant 3.200000e+01 : f32
    %11 = vector.broadcast %cst_3 : f32 to vector<16x1xf32>
    %12 = arith.divf %10, %11 : vector<16x1xf32>
    %13 = vector.broadcast %5 : vector<16x1xf32> to vector<16x32xf32>
    %14 = arith.subf %1, %13 : vector<16x32xf32>
    %cst_4 = arith.constant 9.99999974E-6 : f32
    %15 = vector.broadcast %cst_4 : f32 to vector<16x1xf32>
    %16 = arith.addf %12, %15 : vector<16x1xf32>
    %17 = math.rsqrt %16 : vector<16x1xf32>
    %18 = vector.broadcast %17 : vector<16x1xf32> to vector<16x32xf32>
    %19 = arith.mulf %14, %18 : vector<16x32xf32>
    %c0_5 = arith.constant 0 : index
    %c0_6 = arith.constant 0 : index
    %20 = vector.load %arg2[%c0_5, %c0_6] : memref<1x32xf32, #tpu.memory_space<vmem>>, vector<1x32xf32>
    %21 = vector.broadcast %20 : vector<1x32xf32> to vector<16x32xf32>
    %22 = arith.mulf %19, %21 : vector<16x32xf32>
    %c0_7 = arith.constant 0 : index
    %c0_8 = arith.constant 0 : index
    %23 = vector.load %arg3[%c0_7, %c0_8] : memref<1x32xf32, #tpu.memory_space<vmem>>, vector<1x32xf32>
    %24 = vector.broadcast %23 : vector<1x32xf32> to vector<16x32xf32>
    %25 = arith.addf %22, %24 : vector<16x32xf32>
    %c0_9 = arith.constant 0 : index
    %c0_10 = arith.constant 0 : index
    %26 = vector.load %arg4[%c0_9, %c0_10] : memref<16x32xf32, #tpu.memory_space<vmem>>, vector<16x32xf32>
    tpu.vector_store %arg4[%c0_9, %c0_10], %25 {strides = array<i32>} : memref<16x32xf32, #tpu.memory_space<vmem>>, vector<16x32xf32>,
    return
  }
  func.func @transform_0(%arg0: i32) -> (i32, i32) {
    %c0_i32 = arith.constant 0 : i32
    %c0_i32_0 = arith.constant 0 : i32
    return %arg0, %c0_i32 : i32, i32
  }
  func.func @transform_1(%arg0: i32) -> (i32, i32) {
    %c0_i32 = arith.constant 0 : i32
    %c0_i32_0 = arith.constant 0 : i32
    %c0_i32_1 = arith.constant 0 : i32
    return %c0_i32, %c0_i32_0 : i32, i32
  }
  func.func @transform_2(%arg0: i32) -> (i32, i32) {
    %c0_i32 = arith.constant 0 : i32
    %c0_i32_0 = arith.constant 0 : i32
    %c0_i32_1 = arith.constant 0 : i32
    return %c0_i32, %c0_i32_0 : i32, i32
  }
  func.func @transform_3(%arg0: i32) -> (i32, i32) {
    %c0_i32 = arith.constant 0 : i32
    %c0_i32_0 = arith.constant 0 : i32
    return %arg0, %c0_i32 : i32, i32
  }
}

</mosaic_0001>

<llo_original>
// kernel: base_encoder_forward.15
$region0: #{base_encoder_forward.15}
  #allocation0 [shape = 'u32[]', space=smem, size = 0x4, offset = 0x4, fixed_abs, tag = 'smem constant byte address 0x4 - core index']
  #allocation1 [shape = 'u32[72,128]{1,0:T(1,128)}', space=vmem, size = 0x9000, scoped, tag = 'internal scratch']
  %s0 = inlined_call_operand.vmem [shape: bf16[216,9], index: 0, kind: input, shape index: {}]
  %s1 = inlined_call_operand.vmem [shape: bf16[9,32], index: 1, kind: input, shape index: {}]
  %s2 = inlined_call_operand.vmem [shape: f32[1,32], index: 2, kind: input, shape index: {}]
  %s3 = inlined_call_operand.vmem [shape: bf16[216,32], index: 3, kind: output, shape index: {}]
  %s4 = sld [smem:[#allocation0]]
  $region22: #{base_encoder_forward.15} parent=0
    _
  %s6 = ssub.s32 1, %s4
  %s7 = scalar_select 0, %s6, %s4
  // Predicated region
  $region2: #{base_encoder_forward.15} parent=0 // pred_check
    _
  $region3: #{base_encoder_forward.15} parent=0 // pred_check_branch
    %9 = sbr.rel (0) target = $region5
  $region4: #{base_encoder_forward.15} parent=0 // pred_region
    _
  $region5: #{base_encoder_forward.15} parent=0 // pred_fallthru
    _
  // Predicated region
  $region6: #{base_encoder_forward.15} parent=0 // pred_check
    _
  $region7: #{base_encoder_forward.15} parent=0 // pred_check_branch
    %11 = sbr.rel (0) target = $region9
  $region8: #{base_encoder_forward.15} parent=0 // pred_region
    _
  $region9: #{base_encoder_forward.15} parent=0 // pred_fallthru
    _
  // Predicated region
  $region10: #{base_encoder_forward.15} parent=0 // pred_check
    _
  $region11: #{base_encoder_forward.15} parent=0 // pred_check_branch
    %13 = sbr.rel (0) target = $region13
  $region12: #{base_encoder_forward.15} parent=0 // pred_region
    _
  $region13: #{base_encoder_forward.15} parent=0 // pred_fallthru
    _
  %v15 = vld [vmem:[%s0] sm:$0xf]
  %v16 = vld [vmem:[%s0 + $0x4] sm:$0xf]
  %v17 = vld [vmem:[%s0 + $0x8] sm:$0xf]
  %v18 = vld [vmem:[%s0 + $0xc] sm:$0xf]
  %v19 = vld [vmem:[%s0 + $0x10] sm:$0xf]
  %v20 = vld [vmem:[%s0 + $0x14] sm:$0xf]
  %v21 = vld [vmem:[%s0 + $0x18] sm:$0xf]
  %v22 = vld [vmem:[%s0 + $0x1c] sm:$0xf]
  %v23 = vld [vmem:[%s0 + $0x20] sm:$0xf]
  %v24 = vld [vmem:[%s0 + $0x24] sm:$0xf]
  %v25 = vld [vmem:[%s0 + $0x28] sm:$0xf]
  %v26 = vld [vmem:[%s0 + $0x2c] sm:$0xf]
  %v27 = vld [vmem:[%s0 + $0x30] sm:$0xf]
  %v28 = vld [vmem:[%s0 + $0x34] sm:$0xf]
  %v29 = vld [vmem:[%s0 + $0x38] sm:$0xf]
  %v30 = vld [vmem:[%s0 + $0x3c] sm:$0xf]
  %v31 = vld [vmem:[%s0 + $0x40] sm:$0xf]
  %v32 = vld [vmem:[%s0 + $0x44] sm:$0xf]
  %v33 = vld [vmem:[%s0 + $0x48] sm:$0xf]
  %v34 = vld [vmem:[%s0 + $0x4c] sm:$0xf]
  %v35 = vld [vmem:[%s0 + $0x50] sm:$0xf]
  %v36 = vld [vmem:[%s0 + $0x54] sm:$0xf]
  %v37 = vld [vmem:[%s0 + $0x58] sm:$0xf]
  %v38 = vld [vmem:[%s0 + $0x5c] sm:$0xf]
  %v39 = vld [vmem:[%s0 + $0x60] sm:$0xf]
  %v40 = vld [vmem:[%s0 + $0x64] sm:$0xf]
  %v41 = vld [vmem:[%s0 + $0x68] sm:$0xf]
  %v42 = vld [vmem:[%s1] sm:$0xf]
  %v43 = vld [vmem:[%s1 + $0x4] sm:$0x1]
  %v44 = vld [vmem:[%s2] sm:$0x1]
  %v46 = vperm.slane %v44, 0
  %v75 = vunpack.c.l.b16 %v15
  %v76 = vunpack.c.l.b16 %v16
  %v77 = vunpack.c.l.b16 %v17
  %v78 = vunpack.c.l.b16 %v18
  %v79 = vunpack.c.l.b16 %v19
  %v80 = vunpack.c.l.b16 %v20
  %v81 = vunpack.c.l.b16 %v21
  %v82 = vunpack.c.l.b16 %v22
  %v83 = vunpack.c.l.b16 %v23
  %v84 = vunpack.c.l.b16 %v24
  %v85 = vunpack.c.l.b16 %v25
  %v86 = vunpack.c.l.b16 %v26
  %v87 = vunpack.c.l.b16 %v27
  %v88 = vunpack.c.l.b16 %v28
  %v89 = vunpack.c.l.b16 %v29
  %v90 = vunpack.c.l.b16 %v30
  %v91 = vunpack.c.l.b16 %v31
  %v92 = vunpack.c.l.b16 %v32
  %v93 = vunpack.c.l.b16 %v33
  %v94 = vunpack.c.l.b16 %v34
  %v95 = vunpack.c.l.b16 %v35
  %v96 = vunpack.c.l.b16 %v36
  %v97 = vunpack.c.l.b16 %v37
  %v98 = vunpack.c.l.b16 %v38
  %v99 = vunpack.c.l.b16 %v39
  %v100 = vunpack.c.l.b16 %v40
  %v101 = vunpack.c.l.b16 %v41
  %v102 = vpack.c.b16 %v76, %v75
  %v103 = vpack.c.b16 %v78, %v77
  %v104 = vpack.c.b16 %v80, %v79
  %v105 = vpack.c.b16 %v82, %v81
  %v106 = vpack.c.b16 %v84, %v83
  %v107 = vpack.c.b16 %v86, %v85
  %v108 = vpack.c.b16 %v88, %v87
  %v109 = vpack.c.b16 %v90, %v89
  %v110 = vpack.c.b16 %v92, %v91
  %v111 = vpack.c.b16 %v94, %v93
  %v112 = vpack.c.b16 %v96, %v95
  %v113 = vpack.c.b16 %v98, %v97
  %v114 = vpack.c.b16 %v100, %v99
  %v115 = vpack.c.b16 %v101, %v101
  %v118 = vunpack.c.l.b16 %v42
  %v119 = vunpack.c.l.b16 %v43
  %v120 = vpack.c.b16 %v119, %v118
  %vm121 = vcmask 72704
  %v123 = vsel %vm121, %v102, 0
  %v126 = vsel %vm121, %v103, 0
  %v129 = vsel %vm121, %v104, 0
  %v132 = vsel %vm121, %v105, 0
  %v135 = vsel %vm121, %v106, 0
  %v138 = vsel %vm121, %v107, 0
  %v141 = vsel %vm121, %v108, 0
  %v144 = vsel %vm121, %v109, 0
  %v147 = vsel %vm121, %v110, 0
  %v150 = vsel %vm121, %v111, 0
  %v153 = vsel %vm121, %v112, 0
  %v156 = vsel %vm121, %v113, 0
  %v159 = vsel %vm121, %v114, 0
  %v162 = vsel %vm121, %v115, 0
  %vm164 = vcmask 1043456
  %vm165 = vcmask 1044480
  %v166 = vsel %vm164, 4294967295, 65535
  %v167 = vsel %vm165, %v166, 0
  %v169 = vand.u32 %v120, %v167
  %171 = vmatpush.bf16.msra.mxu0 0
  %172 = vmatpush.bf16.msra.mxu0 0
  %173 = vmatpush.bf16.msra.mxu0 0
  %174 = vmatpush.bf16.msra.mxu0 0
  %175 = vmatpush.bf16.msra.mxu0 0
  %176 = vmatpush.bf16.msra.mxu0 0
  %177 = vmatpush.bf16.msra.mxu0 0
  %178 = vmatpush.bf16.msra.mxu0 %v169
  %179 = vmatmul.bf16.gmra.mxu0 %v123
  %v180 = vpop.f32.mrf.mxu0
  %v181 = vadd.f32 %v46, %v180
  %v182 = vpop.f32.mrf.mxu0
  %v183 = vadd.f32 %v46, %v182
  %184 = vmatmul.bf16.gmra.mxu0 %v126
  %v185 = vpop.f32.mrf.mxu0
  %v186 = vadd.f32 %v46, %v185
  %v187 = vpop.f32.mrf.mxu0
  %v188 = vadd.f32 %v46, %v187
  %189 = vmatmul.bf16.gmra.mxu0 %v129
  %v190 = vpop.f32.mrf.mxu0
  %v191 = vadd.f32 %v46, %v190
  %v192 = vpop.f32.mrf.mxu0
  %v193 = vadd.f32 %v46, %v192
  %194 = vmatmul.bf16.gmra.mxu0 %v132
  %v195 = vpop.f32.mrf.mxu0
  %v196 = vadd.f32 %v46, %v195
  %v197 = vpop.f32.mrf.mxu0
  %v198 = vadd.f32 %v46, %v197
  %199 = vmatmul.bf16.gmra.mxu0 %v135
  %v200 = vpop.f32.mrf.mxu0
  %v201 = vadd.f32 %v46, %v200
  %v202 = vpop.f32.mrf.mxu0
  %v203 = vadd.f32 %v46, %v202
  %204 = vmatmul.bf16.gmra.mxu0 %v138
  %v205 = vpop.f32.mrf.mxu0
  %v206 = vadd.f32 %v46, %v205
  %v207 = vpop.f32.mrf.mxu0
  %v208 = vadd.f32 %v46, %v207
  %209 = vmatmul.bf16.gmra.mxu0 %v141
  %v210 = vpop.f32.mrf.mxu0
  %v211 = vadd.f32 %v46, %v210
  %v212 = vpop.f32.mrf.mxu0
  %v213 = vadd.f32 %v46, %v212
  %214 = vmatmul.bf16.gmra.mxu0 %v144
  %v215 = vpop.f32.mrf.mxu0
  %v216 = vadd.f32 %v46, %v215
  %v217 = vpop.f32.mrf.mxu0
  %v218 = vadd.f32 %v46, %v217
  %219 = vmatmul.bf16.gmra.mxu0 %v147
  %v220 = vpop.f32.mrf.mxu0
  %v221 = vadd.f32 %v46, %v220
  %v222 = vpop.f32.mrf.mxu0
  %v223 = vadd.f32 %v46, %v222
  %224 = vmatmul.bf16.gmra.mxu0 %v150
  %v225 = vpop.f32.mrf.mxu0
  %v226 = vadd.f32 %v46, %v225
  %v227 = vpop.f32.mrf.mxu0
  %v228 = vadd.f32 %v46, %v227
  %229 = vmatmul.bf16.gmra.mxu0 %v153
  %v230 = vpop.f32.mrf.mxu0
  %v231 = vadd.f32 %v46, %v230
  %v232 = vpop.f32.mrf.mxu0
  %v233 = vadd.f32 %v46, %v232
  %234 = vmatmul.bf16.gmra.mxu0 %v156
  %v235 = vpop.f32.mrf.mxu0
  %v236 = vadd.f32 %v46, %v235
  %v237 = vpop.f32.mrf.mxu0
  %v238 = vadd.f32 %v46, %v237
  %239 = vmatmul.bf16.gmra.mxu0 %v159
  %v240 = vpop.f32.mrf.mxu0
  %v241 = vadd.f32 %v46, %v240
  %v242 = vpop.f32.mrf.mxu0
  %v243 = vadd.f32 %v46, %v242
  %244 = vmatmul.bf16.gmra.mxu0 %v162
  %v245 = vpop.f32.mrf.mxu0
  %v246 = vadd.f32 %v46, %v245
  %v247 = vpop.f32.mrf.mxu0
  %248 = vdwg.mxu0
  %v249 = vmax.f32 %v181, 0.0
  %v250 = vmax.f32 %v183, 0.0
  %v251 = vmax.f32 %v186, 0.0
  %v252 = vmax.f32 %v188, 0.0
  %v253 = vmax.f32 %v191, 0.0
  %v254 = vmax.f32 %v193, 0.0
  %v255 = vmax.f32 %v196, 0.0
  %v256 = vmax.f32 %v198, 0.0
  %v257 = vmax.f32 %v201, 0.0
  %v258 = vmax.f32 %v203, 0.0
  %v259 = vmax.f32 %v206, 0.0
  %v260 = vmax.f32 %v208, 0.0
  %v261 = vmax.f32 %v211, 0.0
  %v262 = vmax.f32 %v213, 0.0
  %v263 = vmax.f32 %v216, 0.0
  %v264 = vmax.f32 %v218, 0.0
  %v265 = vmax.f32 %v221, 0.0
  %v266 = vmax.f32 %v223, 0.0
  %v267 = vmax.f32 %v226, 0.0
  %v268 = vmax.f32 %v228, 0.0
  %v269 = vmax.f32 %v231, 0.0
  %v270 = vmax.f32 %v233, 0.0
  %v271 = vmax.f32 %v236, 0.0
  %v272 = vmax.f32 %v238, 0.0
  %v273 = vmax.f32 %v241, 0.0
  %v274 = vmax.f32 %v243, 0.0
  %v275 = vmax.f32 %v246, 0.0
  %v276 = vpack.c.bf16 %v249, %v249
  %v277 = vpack.c.bf16 %v250, %v250
  %v278 = vpack.c.bf16 %v251, %v251
  %v279 = vpack.c.bf16 %v252, %v252
  %v280 = vpack.c.bf16 %v253, %v253
  %v281 = vpack.c.bf16 %v254, %v254
  %v282 = vpack.c.bf16 %v255, %v255
  %v283 = vpack.c.bf16 %v256, %v256
  %v284 = vpack.c.bf16 %v257, %v257
  %v285 = vpack.c.bf16 %v258, %v258
  %v286 = vpack.c.bf16 %v259, %v259
  %v287 = vpack.c.bf16 %v260, %v260
  %v288 = vpack.c.bf16 %v261, %v261
  %v289 = vpack.c.bf16 %v262, %v262
  %v290 = vpack.c.bf16 %v263, %v263
  %v291 = vpack.c.bf16 %v264, %v264
  %v292 = vpack.c.bf16 %v265, %v265
  %v293 = vpack.c.bf16 %v266, %v266
  %v294 = vpack.c.bf16 %v267, %v267
  %v295 = vpack.c.bf16 %v268, %v268
  %v296 = vpack.c.bf16 %v269, %v269
  %v297 = vpack.c.bf16 %v270, %v270
  %v298 = vpack.c.bf16 %v271, %v271
  %v299 = vpack.c.bf16 %v272, %v272
  %v300 = vpack.c.bf16 %v273, %v273
  %v301 = vpack.c.bf16 %v274, %v274
  %v302 = vpack.c.bf16 %v275, %v275
  %vm303 = vcmask 257024
  %304 = vst.msk [vmem:[%s3] sm:$0xf] %vm303, %v276
  %305 = vst.msk [vmem:[%s3 + $0x4] sm:$0xf] %vm303, %v277
  %306 = vst.msk [vmem:[%s3 + $0x8] sm:$0xf] %vm303, %v278
  %307 = vst.msk [vmem:[%s3 + $0xc] sm:$0xf] %vm303, %v279
  %308 = vst.msk [vmem:[%s3 + $0x10] sm:$0xf] %vm303, %v280
  %309 = vst.msk [vmem:[%s3 + $0x14] sm:$0xf] %vm303, %v281
  %310 = vst.msk [vmem:[%s3 + $0x18] sm:$0xf] %vm303, %v282
  %311 = vst.msk [vmem:[%s3 + $0x1c] sm:$0xf] %vm303, %v283
  %312 = vst.msk [vmem:[%s3 + $0x20] sm:$0xf] %vm303, %v284
  %313 = vst.msk [vmem:[%s3 + $0x24] sm:$0xf] %vm303, %v285
  %314 = vst.msk [vmem:[%s3 + $0x28] sm:$0xf] %vm303, %v286
  %315 = vst.msk [vmem:[%s3 + $0x2c] sm:$0xf] %vm303, %v287
  %316 = vst.msk [vmem:[%s3 + $0x30] sm:$0xf] %vm303, %v288
  %317 = vst.msk [vmem:[%s3 + $0x34] sm:$0xf] %vm303, %v289
  %318 = vst.msk [vmem:[%s3 + $0x38] sm:$0xf] %vm303, %v290
  %319 = vst.msk [vmem:[%s3 + $0x3c] sm:$0xf] %vm303, %v291
  %320 = vst.msk [vmem:[%s3 + $0x40] sm:$0xf] %vm303, %v292
  %321 = vst.msk [vmem:[%s3 + $0x44] sm:$0xf] %vm303, %v293
  %322 = vst.msk [vmem:[%s3 + $0x48] sm:$0xf] %vm303, %v294
  %323 = vst.msk [vmem:[%s3 + $0x4c] sm:$0xf] %vm303, %v295
  %324 = vst.msk [vmem:[%s3 + $0x50] sm:$0xf] %vm303, %v296
  %325 = vst.msk [vmem:[%s3 + $0x54] sm:$0xf] %vm303, %v297
  %326 = vst.msk [vmem:[%s3 + $0x58] sm:$0xf] %vm303, %v298
  %327 = vst.msk [vmem:[%s3 + $0x5c] sm:$0xf] %vm303, %v299
  %328 = vst.msk [vmem:[%s3 + $0x60] sm:$0xf] %vm303, %v300
  %329 = vst.msk [vmem:[%s3 + $0x64] sm:$0xf] %vm303, %v301
  %330 = vst.msk [vmem:[%s3 + $0x68] sm:$0xf] %vm303, %v302
  // Predicated region
  $region14: #{base_encoder_forward.15} parent=0 // pred_check
    _
  $region15: #{base_encoder_forward.15} parent=0 // pred_check_branch
    %332 = sbr.rel (0) target = $region17
  $region16: #{base_encoder_forward.15} parent=0 // pred_region
    _
  $region17: #{base_encoder_forward.15} parent=0 // pred_fallthru
    _
  // Predicated region
  $region18: #{base_encoder_forward.15} parent=0 // pred_check
    _
  $region19: #{base_encoder_forward.15} parent=0 // pred_check_branch
    %334 = sbr.rel (0) target = $region21
  $region20: #{base_encoder_forward.15} parent=0 // pred_region
    _
  $region21: #{base_encoder_forward.15} parent=0 // pred_fallthru
    _

// kernel: base_encoder_forward.16
$region0: #{base_encoder_forward.16}
  #allocation0 [shape = 'u32[]', space=smem, size = 0x4, offset = 0x4, fixed_abs, tag = 'smem constant byte address 0x4 - core index']
  #allocation1 [shape = 'u32[72,128]{1,0:T(1,128)}', space=vmem, size = 0x9000, scoped, tag = 'internal scratch']
  %s0 = inlined_call_operand.vmem [shape: bf16[48,288], index: 0, kind: input, shape index: {}]
  %s1 = inlined_call_operand.vmem [shape: bf16[288,32], index: 1, kind: input, shape index: {}]
  %s2 = inlined_call_operand.vmem [shape: f32[1,32], index: 2, kind: input, shape index: {}]
  %s3 = inlined_call_operand.vmem [shape: bf16[48,32], index: 3, kind: output, shape index: {}]
  %s4 = sld [smem:[#allocation0]]
  $region22: #{base_encoder_forward.16} parent=0
    _
  %s6 = ssub.s32 1, %s4
  %s7 = scalar_select 0, %s6, %s4
  // Predicated region
  $region2: #{base_encoder_forward.16} parent=0 // pred_check
    _
  $region3: #{base_encoder_forward.16} parent=0 // pred_check_branch
    %9 = sbr.rel (0) target = $region5
  $region4: #{base_encoder_forward.16} parent=0 // pred_region
    _
  $region5: #{base_encoder_forward.16} parent=0 // pred_fallthru
    _
  // Predicated region
  $region6: #{base_encoder_forward.16} parent=0 // pred_check
    _
  $region7: #{base_encoder_forward.16} parent=0 // pred_check_branch
    %11 = sbr.rel (0) target = $region9
  $region8: #{base_encoder_forward.16} parent=0 // pred_region
    _
  $region9: #{base_encoder_forward.16} parent=0 // pred_fallthru
    _
  // Predicated region
  $region10: #{base_encoder_forward.16} parent=0 // pred_check
    _
  $region11: #{base_encoder_forward.16} parent=0 // pred_check_branch
    %13 = sbr.rel (0) target = $region13
  $region12: #{base_encoder_forward.16} parent=0 // pred_region
    _
  $region13: #{base_encoder_forward.16} parent=0 // pred_fallthru
    _
  %v15 = vld [vmem:[%s0] sm:$0xff]
  %v16 = vld [vmem:[%s0 + $0x8] sm:$0xf]
  %v17 = vld [vmem:[%s0 + $0xc] sm:$0xff]
  %v18 = vld [vmem:[%s0 + $0x14] sm:$0xf]
  %v19 = vld [vmem:[%s0 + $0x18] sm:$0xff]
  %v20 = vld [vmem:[%s0 + $0x20] sm:$0xf]
  %v21 = vld [vmem:[%s0 + $0x24] sm:$0xff]
  %v22 = vld [vmem:[%s0 + $0x2c] sm:$0xf]
  %v23 = vld [vmem:[%s0 + $0x30] sm:$0xff]
  %v24 = vld [vmem:[%s0 + $0x38] sm:$0xf]
  %v25 = vld [vmem:[%s0 + $0x3c] sm:$0xff]
  %v26 = vld [vmem:[%s0 + $0x44] sm:$0xf]
  %v27 = vld [vmem:[%s1] sm:$0xf]
  %v28 = vld [vmem:[%s1 + $0x4] sm:$0xf]
  %v29 = vld [vmem:[%s1 + $0x8] sm:$0xf]
  %v30 = vld [vmem:[%s1 + $0xc] sm:$0xf]
  %v31 = vld [vmem:[%s1 + $0x10] sm:$0xf]
  %v32 = vld [vmem:[%s1 + $0x14] sm:$0xf]
  %v33 = vld [vmem:[%s1 + $0x18] sm:$0xf]
  %v34 = vld [vmem:[%s1 + $0x1c] sm:$0xf]
  %v35 = vld [vmem:[%s1 + $0x20] sm:$0xf]
  %v36 = vld [vmem:[%s1 + $0x24] sm:$0xf]
  %v37 = vld [vmem:[%s1 + $0x28] sm:$0xf]
  %v38 = vld [vmem:[%s1 + $0x2c] sm:$0xf]
  %v39 = vld [vmem:[%s1 + $0x30] sm:$0xf]
  %v40 = vld [vmem:[%s1 + $0x34] sm:$0xf]
  %v41 = vld [vmem:[%s1 + $0x38] sm:$0xf]
  %v42 = vld [vmem:[%s1 + $0x3c] sm:$0xf]
  %v43 = vld [vmem:[%s1 + $0x40] sm:$0xf]
  %v44 = vld [vmem:[%s1 + $0x44] sm:$0xf]
  %v45 = vld [vmem:[%s1 + $0x48] sm:$0xf]
  %v46 = vld [vmem:[%s1 + $0x4c] sm:$0xf]
  %v47 = vld [vmem:[%s1 + $0x50] sm:$0xf]
  %v48 = vld [vmem:[%s1 + $0x54] sm:$0xf]
  %v49 = vld [vmem:[%s1 + $0x58] sm:$0xf]
  %v50 = vld [vmem:[%s1 + $0x5c] sm:$0xf]
  %v51 = vld [vmem:[%s1 + $0x60] sm:$0xf]
  %v52 = vld [vmem:[%s1 + $0x64] sm:$0xf]
  %v53 = vld [vmem:[%s1 + $0x68] sm:$0xf]
  %v54 = vld [vmem:[%s1 + $0x6c] sm:$0xf]
  %v55 = vld [vmem:[%s1 + $0x70] sm:$0xf]
  %v56 = vld [vmem:[%s1 + $0x74] sm:$0xf]
  %v57 = vld [vmem:[%s1 + $0x78] sm:$0xf]
  %v58 = vld [vmem:[%s1 + $0x7c] sm:$0xf]
  %v59 = vld [vmem:[%s1 + $0x80] sm:$0xf]
  %v60 = vld [vmem:[%s1 + $0x84] sm:$0xf]
  %v61 = vld [vmem:[%s1 + $0x88] sm:$0xf]
  %v62 = vld [vmem:[%s1 + $0x8c] sm:$0xf]
  %v63 = vld [vmem:[%s2] sm:$0x1]
  %v65 = vperm.slane %v63, 0
  %v79 = vunpack.c.l.b16 %v15
  %v80 = vunpack.c.h.b16 %v15
  %v81 = vunpack.c.l.b16 %v16
  %v82 = vunpack.c.l.b16 %v17
  %v83 = vunpack.c.h.b16 %v17
  %v84 = vunpack.c.l.b16 %v18
  %v85 = vunpack.c.l.b16 %v19
  %v86 = vunpack.c.h.b16 %v19
  %v87 = vunpack.c.l.b16 %v20
  %v88 = vunpack.c.l.b16 %v21
  %v89 = vunpack.c.h.b16 %v21
  %v90 = vunpack.c.l.b16 %v22
  %v91 = vunpack.c.l.b16 %v23
  %v92 = vunpack.c.h.b16 %v23
  %v93 = vunpack.c.l.b16 %v24
  %v94 = vunpack.c.l.b16 %v25
  %v95 = vunpack.c.h.b16 %v25
  %v96 = vunpack.c.l.b16 %v26
  %v97 = vpack.c.b16 %v82, %v79
  %v98 = vpack.c.b16 %v83, %v80
  %v99 = vpack.c.b16 %v84, %v81
  %v100 = vpack.c.b16 %v88, %v85
  %v101 = vpack.c.b16 %v89, %v86
  %v102 = vpack.c.b16 %v90, %v87
  %v103 = vpack.c.b16 %v94, %v91
  %v104 = vpack.c.b16 %v95, %v92
  %v105 = vpack.c.b16 %v96, %v93
  %v148 = vunpack.c.l.b16 %v27
  %v149 = vunpack.c.l.b16 %v28
  %v150 = vunpack.c.l.b16 %v29
  %v151 = vunpack.c.l.b16 %v30
  %v152 = vunpack.c.l.b16 %v31
  %v153 = vunpack.c.l.b16 %v32
  %v154 = vunpack.c.l.b16 %v33
  %v155 = vunpack.c.l.b16 %v34
  %v156 = vunpack.c.l.b16 %v35
  %v157 = vunpack.c.l.b16 %v36
  %v158 = vunpack.c.l.b16 %v37
  %v159 = vunpack.c.l.b16 %v38
  %v160 = vunpack.c.l.b16 %v39
  %v161 = vunpack.c.l.b16 %v40
  %v162 = vunpack.c.l.b16 %v41
  %v163 = vunpack.c.l.b16 %v42
  %v164 = vunpack.c.l.b16 %v43
  %v165 = vunpack.c.l.b16 %v44
  %v166 = vunpack.c.l.b16 %v45
  %v167 = vunpack.c.l.b16 %v46
  %v168 = vunpack.c.l.b16 %v47
  %v169 = vunpack.c.l.b16 %v48
  %v170 = vunpack.c.l.b16 %v49
  %v171 = vunpack.c.l.b16 %v50
  %v172 = vunpack.c.l.b16 %v51
  %v173 = vunpack.c.l.b16 %v52
  %v174 = vunpack.c.l.b16 %v53
  %v175 = vunpack.c.l.b16 %v54
  %v176 = vunpack.c.l.b16 %v55
  %v177 = vunpack.c.l.b16 %v56
  %v178 = vunpack.c.l.b16 %v57
  %v179 = vunpack.c.l.b16 %v58
  %v180 = vunpack.c.l.b16 %v59
  %v181 = vunpack.c.l.b16 %v60
  %v182 = vunpack.c.l.b16 %v61
  %v183 = vunpack.c.l.b16 %v62
  %v184 = vpack.c.b16 %v149, %v148
  %v185 = vpack.c.b16 %v151, %v150
  %v186 = vpack.c.b16 %v153, %v152
  %v187 = vpack.c.b16 %v155, %v154
  %v188 = vpack.c.b16 %v157, %v156
  %v189 = vpack.c.b16 %v159, %v158
  %v190 = vpack.c.b16 %v161, %v160
  %v191 = vpack.c.b16 %v163, %v162
  %v192 = vpack.c.b16 %v165, %v164
  %v193 = vpack.c.b16 %v167, %v166
  %v194 = vpack.c.b16 %v169, %v168
  %v195 = vpack.c.b16 %v171, %v170
  %v196 = vpack.c.b16 %v173, %v172
  %v197 = vpack.c.b16 %v175, %v174
  %v198 = vpack.c.b16 %v177, %v176
  %v199 = vpack.c.b16 %v179, %v178
  %v200 = vpack.c.b16 %v181, %v180
  %v201 = vpack.c.b16 %v183, %v182
  %vm220 = vcmask 261120
  %v222 = vsel %vm220, %v99, 0
  %v225 = vsel %vm220, %v102, 0
  %v228 = vsel %vm220, %v105, 0
  %230 = vmatpush.bf16.msra.mxu0 %v191
  %231 = vmatpush.bf16.msra.mxu0 %v190
  %232 = vmatpush.bf16.msra.mxu0 %v189
  %233 = vmatpush.bf16.msra.mxu0 %v188
  %234 = vmatpush.bf16.msra.mxu0 %v187
  %235 = vmatpush.bf16.msra.mxu0 %v186
  %236 = vmatpush.bf16.msra.mxu0 %v185
  %237 = vmatpush.bf16.msra.mxu0 %v184
  %238 = vmatmul.bf16.gmra.mxu0 %v97
  %v239 = vpop.f32.mrf.mxu0
  %v240 = vadd.f32 %v65, %v239
  %v241 = vpop.f32.mrf.mxu0
  %v242 = vadd.f32 %v65, %v241
  %243 = vmatmul.bf16.gmra.mxu0 %v100
  %v244 = vpop.f32.mrf.mxu0
  %v245 = vadd.f32 %v65, %v244
  %v246 = vpop.f32.mrf.mxu0
  %v247 = vadd.f32 %v65, %v246
  %248 = vmatmul.bf16.gmra.mxu0 %v103
  %v249 = vpop.f32.mrf.mxu0
  %v250 = vadd.f32 %v65, %v249
  %v251 = vpop.f32.mrf.mxu0
  %v252 = vadd.f32 %v65, %v251
  %253 = vdwg.mxu0
  %254 = vmatpush.bf16.msra.mxu0 %v199
  %255 = vmatpush.bf16.msra.mxu0 %v198
  %256 = vmatpush.bf16.msra.mxu0 %v197
  %257 = vmatpush.bf16.msra.mxu0 %v196
  %258 = vmatpush.bf16.msra.mxu0 %v195
  %259 = vmatpush.bf16.msra.mxu0 %v194
  %260 = vmatpush.bf16.msra.mxu0 %v193
  %261 = vmatpush.bf16.msra.mxu0 %v192
  %262 = vmatmul.bf16.gmra.mxu0 %v98
  %v263 = vpop.f32.mrf.mxu0
  %v264 = vadd.f32 %v240, %v263
  %v265 = vpop.f32.mrf.mxu0
  %v266 = vadd.f32 %v242, %v265
  %267 = vmatmul.bf16.gmra.mxu0 %v101
  %v268 = vpop.f32.mrf.mxu0
  %v269 = vadd.f32 %v245, %v268
  %v270 = vpop.f32.mrf.mxu0
  %v271 = vadd.f32 %v247, %v270
  %272 = vmatmul.bf16.gmra.mxu0 %v104
  %v273 = vpop.f32.mrf.mxu0
  %v274 = vadd.f32 %v250, %v273
  %v275 = vpop.f32.mrf.mxu0
  %v276 = vadd.f32 %v252, %v275
  %277 = vdwg.mxu0
  %278 = vmatpush.bf16.msra.mxu0 0
  %279 = vmatpush.bf16.msra.mxu0 0
  %280 = vmatpush.bf16.msra.mxu0 0
  %281 = vmatpush.bf16.msra.mxu0 0
  %282 = vmatpush.bf16.msra.mxu0 0
  %283 = vmatpush.bf16.msra.mxu0 0
  %284 = vmatpush.bf16.msra.mxu0 %v201
  %285 = vmatpush.bf16.msra.mxu0 %v200
  %286 = vmatmul.bf16.gmra.mxu0 %v222
  %v287 = vpop.f32.mrf.mxu0
  %v288 = vadd.f32 %v264, %v287
  %v289 = vpop.f32.mrf.mxu0
  %v290 = vadd.f32 %v266, %v289
  %291 = vmatmul.bf16.gmra.mxu0 %v225
  %v292 = vpop.f32.mrf.mxu0
  %v293 = vadd.f32 %v269, %v292
  %v294 = vpop.f32.mrf.mxu0
  %v295 = vadd.f32 %v271, %v294
  %296 = vmatmul.bf16.gmra.mxu0 %v228
  %v297 = vpop.f32.mrf.mxu0
  %v298 = vadd.f32 %v274, %v297
  %v299 = vpop.f32.mrf.mxu0
  %v300 = vadd.f32 %v276, %v299
  %301 = vdwg.mxu0
  %v302 = vmax.f32 %v288, 0.0
  %v303 = vmax.f32 %v290, 0.0
  %v304 = vmax.f32 %v293, 0.0
  %v305 = vmax.f32 %v295, 0.0
  %v306 = vmax.f32 %v298, 0.0
  %v307 = vmax.f32 %v300, 0.0
  %v308 = vpack.c.bf16 %v302, %v302
  %v309 = vpack.c.bf16 %v303, %v303
  %v310 = vpack.c.bf16 %v304, %v304
  %v311 = vpack.c.bf16 %v305, %v305
  %v312 = vpack.c.bf16 %v306, %v306
  %v313 = vpack.c.bf16 %v307, %v307
  %vm314 = vcmask 257024
  %315 = vst.msk [vmem:[%s3] sm:$0xf] %vm314, %v308
  %316 = vst.msk [vmem:[%s3 + $0x4] sm:$0xf] %vm314, %v309
  %317 = vst.msk [vmem:[%s3 + $0x8] sm:$0xf] %vm314, %v310
  %318 = vst.msk [vmem:[%s3 + $0xc] sm:$0xf] %vm314, %v311
  %319 = vst.msk [vmem:[%s3 + $0x10] sm:$0xf] %vm314, %v312
  %320 = vst.msk [vmem:[%s3 + $0x14] sm:$0xf] %vm314, %v313
  // Predicated region
  $region14: #{base_encoder_forward.16} parent=0 // pred_check
    _
  $region15: #{base_encoder_forward.16} parent=0 // pred_check_branch
    %322 = sbr.rel (0) target = $region17
  $region16: #{base_encoder_forward.16} parent=0 // pred_region
    _
  $region17: #{base_encoder_forward.16} parent=0 // pred_fallthru
    _
  // Predicated region
  $region18: #{base_encoder_forward.16} parent=0 // pred_check
    _
  $region19: #{base_encoder_forward.16} parent=0 // pred_check_branch
    %324 = sbr.rel (0) target = $region21
  $region20: #{base_encoder_forward.16} parent=0 // pred_region
    _
  $region21: #{base_encoder_forward.16} parent=0 // pred_fallthru
    _

// kernel: base_encoder_forward.17
$region0: #{base_encoder_forward.17}
  #allocation0 [shape = 'u32[]', space=smem, size = 0x4, offset = 0x4, fixed_abs, tag = 'smem constant byte address 0x4 - core index']
  #allocation1 [shape = 'u32[72,128]{1,0:T(1,128)}', space=vmem, size = 0x9000, scoped, tag = 'internal scratch']
  %s0 = inlined_call_operand.vmem [shape: bf16[16,96], index: 0, kind: input, shape index: {}]
  %s1 = inlined_call_operand.vmem [shape: bf16[96,32], index: 1, kind: input, shape index: {}]
  %s2 = inlined_call_operand.vmem [shape: f32[1,32], index: 2, kind: input, shape index: {}]
  %s3 = inlined_call_operand.vmem [shape: bf16[16,32], index: 3, kind: input, shape index: {}]
  %s4 = inlined_call_operand.vmem [shape: bf16[16,32], index: 4, kind: output, shape index: {}]
  %s5 = sld [smem:[#allocation0]]
  $region26: #{base_encoder_forward.17} parent=0
    _
  %s7 = ssub.s32 1, %s5
  %s8 = scalar_select 0, %s7, %s5
  // Predicated region
  $region2: #{base_encoder_forward.17} parent=0 // pred_check
    _
  $region3: #{base_encoder_forward.17} parent=0 // pred_check_branch
    %10 = sbr.rel (0) target = $region5
  $region4: #{base_encoder_forward.17} parent=0 // pred_region
    _
  $region5: #{base_encoder_forward.17} parent=0 // pred_fallthru
    _
  // Predicated region
  $region6: #{base_encoder_forward.17} parent=0 // pred_check
    _
  $region7: #{base_encoder_forward.17} parent=0 // pred_check_branch
    %12 = sbr.rel (0) target = $region9
  $region8: #{base_encoder_forward.17} parent=0 // pred_region
    _
  $region9: #{base_encoder_forward.17} parent=0 // pred_fallthru
    _
  // Predicated region
  $region10: #{base_encoder_forward.17} parent=0 // pred_check
    _
  $region11: #{base_encoder_forward.17} parent=0 // pred_check_branch
    %14 = sbr.rel (0) target = $region13
  $region12: #{base_encoder_forward.17} parent=0 // pred_region
    _
  $region13: #{base_encoder_forward.17} parent=0 // pred_fallthru
    _
  // Predicated region
  $region14: #{base_encoder_forward.17} parent=0 // pred_check
    _
  $region15: #{base_encoder_forward.17} parent=0 // pred_check_branch
    %16 = sbr.rel (0) target = $region17
  $region16: #{base_encoder_forward.17} parent=0 // pred_region
    _
  $region17: #{base_encoder_forward.17} parent=0 // pred_fallthru
    _
  %v18 = vld [vmem:[%s0] sm:$0xf]
  %v19 = vld [vmem:[%s0 + $0x4] sm:$0xf]
  %v20 = vld [vmem:[%s1] sm:$0xf]
  %v21 = vld [vmem:[%s1 + $0x4] sm:$0xf]
  %v22 = vld [vmem:[%s1 + $0x8] sm:$0xf]
  %v23 = vld [vmem:[%s1 + $0xc] sm:$0xf]
  %v24 = vld [vmem:[%s1 + $0x10] sm:$0xf]
  %v25 = vld [vmem:[%s1 + $0x14] sm:$0xf]
  %v26 = vld [vmem:[%s1 + $0x18] sm:$0xf]
  %v27 = vld [vmem:[%s1 + $0x1c] sm:$0xf]
  %v28 = vld [vmem:[%s1 + $0x20] sm:$0xf]
  %v29 = vld [vmem:[%s1 + $0x24] sm:$0xf]
  %v30 = vld [vmem:[%s1 + $0x28] sm:$0xf]
  %v31 = vld [vmem:[%s1 + $0x2c] sm:$0xf]
  %v32 = vld [vmem:[%s2] sm:$0x1]
  %v34 = vperm.slane %v32, 0
  %v38 = vunpack.c.l.b16 %v18
  %v39 = vunpack.c.l.b16 %v19
  %v40 = vpack.c.b16 %v39, %v38
  %v53 = vunpack.c.l.b16 %v20
  %v54 = vunpack.c.l.b16 %v21
  %v55 = vunpack.c.l.b16 %v22
  %v56 = vunpack.c.l.b16 %v23
  %v57 = vunpack.c.l.b16 %v24
  %v58 = vunpack.c.l.b16 %v25
  %v59 = vunpack.c.l.b16 %v26
  %v60 = vunpack.c.l.b16 %v27
  %v61 = vunpack.c.l.b16 %v28
  %v62 = vunpack.c.l.b16 %v29
  %v63 = vunpack.c.l.b16 %v30
  %v64 = vunpack.c.l.b16 %v31
  %v65 = vpack.c.b16 %v54, %v53
  %v66 = vpack.c.b16 %v56, %v55
  %v67 = vpack.c.b16 %v58, %v57
  %v68 = vpack.c.b16 %v60, %v59
  %v69 = vpack.c.b16 %v62, %v61
  %v70 = vpack.c.b16 %v64, %v63
  %vm77 = vcmask 785408
  %v79 = vsel %vm77, %v40, 0
  %81 = vmatpush.bf16.msra.mxu0 0
  %82 = vmatpush.bf16.msra.mxu0 0
  %83 = vmatpush.bf16.msra.mxu0 %v70
  %84 = vmatpush.bf16.msra.mxu0 %v69
  %85 = vmatpush.bf16.msra.mxu0 %v68
  %86 = vmatpush.bf16.msra.mxu0 %v67
  %87 = vmatpush.bf16.msra.mxu0 %v66
  %88 = vmatpush.bf16.msra.mxu0 %v65
  %89 = vmatmul.bf16.gmra.mxu0 %v79
  %v90 = vpop.f32.mrf.mxu0
  %v91 = vadd.f32 %v34, %v90
  %v92 = vpop.f32.mrf.mxu0
  %v93 = vadd.f32 %v34, %v92
  %94 = vdwg.mxu0
  %v95 = vld [vmem:[%s3] sm:$0xf]
  %v96 = vld [vmem:[%s3 + $0x4] sm:$0xf]
  %v97 = vunpack.c.l.bf16 %v95
  %v98 = vunpack.c.l.bf16 %v96
  %v99 = vadd.f32 %v91, %v97
  %v100 = vadd.f32 %v93, %v98
  %v101 = vpack.c.bf16 %v99, %v99
  %v102 = vpack.c.bf16 %v100, %v100
  %vm103 = vcmask 257024
  %104 = vst.msk [vmem:[%s4] sm:$0xf] %vm103, %v101
  %105 = vst.msk [vmem:[%s4 + $0x4] sm:$0xf] %vm103, %v102
  // Predicated region
  $region18: #{base_encoder_forward.17} parent=0 // pred_check
    _
  $region19: #{base_encoder_forward.17} parent=0 // pred_check_branch
    %107 = sbr.rel (0) target = $region21
  $region20: #{base_encoder_forward.17} parent=0 // pred_region
    _
  $region21: #{base_encoder_forward.17} parent=0 // pred_fallthru
    _
  // Predicated region
  $region22: #{base_encoder_forward.17} parent=0 // pred_check
    _
  $region23: #{base_encoder_forward.17} parent=0 // pred_check_branch
    %109 = sbr.rel (0) target = $region25
  $region24: #{base_encoder_forward.17} parent=0 // pred_region
    _
  $region25: #{base_encoder_forward.17} parent=0 // pred_fallthru
    _

// kernel: base_encoder_forward.18
$region0: #{base_encoder_forward.18}
  #allocation0 [shape = 'u32[]', space=smem, size = 0x4, offset = 0x4, fixed_abs, tag = 'smem constant byte address 0x4 - core index']
  #allocation1 [shape = 'u32[72,128]{1,0:T(1,128)}', space=vmem, size = 0x9000, scoped, tag = 'internal scratch']
  %s0 = inlined_call_operand.vmem [shape: bf16[16,32], index: 0, kind: input, shape index: {}]
  %s1 = inlined_call_operand.vmem [shape: f32[1,32], index: 1, kind: input, shape index: {}]
  %s2 = inlined_call_operand.vmem [shape: f32[1,32], index: 2, kind: input, shape index: {}]
  %s3 = inlined_call_operand.vmem [shape: bf16[32,96], index: 3, kind: input, shape index: {}]
  %s4 = inlined_call_operand.vmem [shape: f32[1,96], index: 4, kind: input, shape index: {}]
  %s5 = inlined_call_operand.vmem [shape: bf16[16,96], index: 5, kind: output, shape index: {}]
  %s6 = sld [smem:[#allocation0]]
  $region30: #{base_encoder_forward.18} parent=0
    _
  %s8 = ssub.s32 1, %s6
  %s9 = scalar_select 0, %s8, %s6
  // Predicated region
  $region2: #{base_encoder_forward.18} parent=0 // pred_check
    _
  $region3: #{base_encoder_forward.18} parent=0 // pred_check_branch
    %11 = sbr.rel (0) target = $region5
  $region4: #{base_encoder_forward.18} parent=0 // pred_region
    _
  $region5: #{base_encoder_forward.18} parent=0 // pred_fallthru
    _
  // Predicated region
  $region6: #{base_encoder_forward.18} parent=0 // pred_check
    _
  $region7: #{base_encoder_forward.18} parent=0 // pred_check_branch
    %13 = sbr.rel (0) target = $region9
  $region8: #{base_encoder_forward.18} parent=0 // pred_region
    _
  $region9: #{base_encoder_forward.18} parent=0 // pred_fallthru
    _
  // Predicated region
  $region10: #{base_encoder_forward.18} parent=0 // pred_check
    _
  $region11: #{base_encoder_forward.18} parent=0 // pred_check_branch
    %15 = sbr.rel (0) target = $region13
  $region12: #{base_encoder_forward.18} parent=0 // pred_region
    _
  $region13: #{base_encoder_forward.18} parent=0 // pred_fallthru
    _
  // Predicated region
  $region14: #{base_encoder_forward.18} parent=0 // pred_check
    _
  $region15: #{base_encoder_forward.18} parent=0 // pred_check_branch
    %17 = sbr.rel (0) target = $region17
  $region16: #{base_encoder_forward.18} parent=0 // pred_region
    _
  $region17: #{base_encoder_forward.18} parent=0 // pred_fallthru
    _
  // Predicated region
  $region18: #{base_encoder_forward.18} parent=0 // pred_check
    _
  $region19: #{base_encoder_forward.18} parent=0 // pred_check_branch
    %19 = sbr.rel (0) target = $region21
  $region20: #{base_encoder_forward.18} parent=0 // pred_region
    _
  $region21: #{base_encoder_forward.18} parent=0 // pred_fallthru
    _
  %v21 = vld [vmem:[%s0] sm:$0xf]
  %v22 = vld [vmem:[%s0 + $0x4] sm:$0xf]
  %v23 = vunpack.c.l.bf16 %v21
  %v24 = vunpack.c.l.bf16 %v22
  %vm25 = vcmask 261120
  %v26 = vsel %vm25, %v23, 0.0
  %27 = vadd.xlane.f32.xlu0 %v26
  %v28 = vpop.xlane.xlu0 %27
  %v29 = vsel %vm25, %v24, 0.0
  %30 = vadd.xlane.f32.xlu0 %v29
  %v31 = vpop.xlane.xlu0 %30
  %v32 = vrcp.pop 32.0
  %v33 = vmul.f32 32.0, %v32
  %v34 = vsub.f32 1.0, %v33
  %v35 = vmul.f32 %v32, %v34
  %v36 = vadd.f32 %v32, %v35
  %vm37 = vweird.f32 %v32
  %v38 = vsel %vm37, %v32, %v36
  %v39 = vmul.f32 %v28, %v38
  %v40 = vmul.f32 %v31, %v38
  %v41 = vsub.f32 %v23, %v39
  %v42 = vsub.f32 %v24, %v40
  %v43 = vmul.f32 %v41, %v41
  %v44 = vmul.f32 %v42, %v42
  %v45 = vsel %vm25, %v43, 0.0
  %46 = vadd.xlane.f32.xlu0 %v45
  %v47 = vpop.xlane.xlu0 %46
  %v48 = vsel %vm25, %v44, 0.0
  %49 = vadd.xlane.f32.xlu0 %v48
  %v50 = vpop.xlane.xlu0 %49
  %v51 = vmul.f32 %v47, %v38
  %v52 = vmul.f32 %v50, %v38
  %v53 = vadd.f32 %v51, 1e-05
  %v54 = vadd.f32 %v52, 1e-05
  %v55 = vrsqrt.pop %v53
  %v56 = vmul.f32 %v55, %v53
  %v57 = vmul.f32 %v56, %v55
  %v58 = vmul.f32 0.5, %v57
  %v59 = vsub.f32 1.5, %v58
  %v60 = vmul.f32 %v55, %v59
  %vm61 = vweird.f32 %v53
  %vm62 = vweird.f32 %v55
  %vm63 = vmor %vm61, %vm62
  %v64 = vsel %vm63, %v55, %v60
  %v65 = vrsqrt.pop %v54
  %v66 = vmul.f32 %v65, %v54
  %v67 = vmul.f32 %v66, %v65
  %v68 = vmul.f32 0.5, %v67
  %v69 = vsub.f32 1.5, %v68
  %v70 = vmul.f32 %v65, %v69
  %vm71 = vweird.f32 %v54
  %vm72 = vweird.f32 %v65
  %vm73 = vmor %vm71, %vm72
  %v74 = vsel %vm73, %v65, %v70
  %v75 = vmul.f32 %v41, %v64
  %v76 = vmul.f32 %v42, %v74
  %v77 = vld [vmem:[%s1] sm:$0x1]
  %v79 = vperm.slane %v77, 0
  %v81 = vmul.f32 %v75, %v79
  %v82 = vmul.f32 %v76, %v79
  %v83 = vld [vmem:[%s2] sm:$0x1]
  %v85 = vperm.slane %v83, 0
  %v87 = vadd.f32 %v81, %v85
  %v88 = vadd.f32 %v82, %v85
  %v89 = vpack.c.bf16 %v88, %v87
  %v90 = vld [vmem:[%s3] sm:$0xf]
  %v91 = vld [vmem:[%s3 + $0x4] sm:$0xf]
  %v92 = vld [vmem:[%s3 + $0x8] sm:$0xf]
  %v93 = vld [vmem:[%s3 + $0xc] sm:$0xf]
  %v94 = vld [vmem:[%s4] sm:$0x1]
  %v96 = vperm.slane %v94, 0
  %v102 = vunpack.c.l.b16 %v90
  %v103 = vunpack.c.l.b16 %v91
  %v104 = vunpack.c.l.b16 %v92
  %v105 = vunpack.c.l.b16 %v93
  %v106 = vpack.c.b16 %v103, %v102
  %v107 = vpack.c.b16 %v105, %v104
  %v111 = vsel %vm25, %v89, 0
  %113 = vmatpush.bf16.msra.mxu0 0
  %114 = vmatpush.bf16.msra.mxu0 0
  %115 = vmatpush.bf16.msra.mxu0 0
  %116 = vmatpush.bf16.msra.mxu0 0
  %117 = vmatpush.bf16.msra.mxu0 0
  %118 = vmatpush.bf16.msra.mxu0 0
  %119 = vmatpush.bf16.msra.mxu0 %v107
  %120 = vmatpush.bf16.msra.mxu0 %v106
  %121 = vmatmul.bf16.gmra.mxu0 %v111
  %v122 = vpop.f32.mrf.mxu0
  %v123 = vadd.f32 %v96, %v122
  %v124 = vpop.f32.mrf.mxu0
  %v125 = vadd.f32 %v96, %v124
  %126 = vdwg.mxu0
  %v127 = vpack.c.bf16 %v123, %v123
  %v128 = vpack.c.bf16 %v125, %v125
  %vm129 = vcmask 781312
  %130 = vst.msk [vmem:[%s5] sm:$0xf] %vm129, %v127
  %131 = vst.msk [vmem:[%s5 + $0x4] sm:$0xf] %vm129, %v128
  // Predicated region
  $region22: #{base_encoder_forward.18} parent=0 // pred_check
    _
  $region23: #{base_encoder_forward.18} parent=0 // pred_check_branch
    %133 = sbr.rel (0) target = $region25
  $region24: #{base_encoder_forward.18} parent=0 // pred_region
    _
  $region25: #{base_encoder_forward.18} parent=0 // pred_fallthru
    _
  // Predicated region
  $region26: #{base_encoder_forward.18} parent=0 // pred_check
    _
  $region27: #{base_encoder_forward.18} parent=0 // pred_check_branch
    %135 = sbr.rel (0) target = $region29
  $region28: #{base_encoder_forward.18} parent=0 // pred_region
    _
  $region29: #{base_encoder_forward.18} parent=0 // pred_fallthru
    _

// kernel: base_encoder_forward.20
$region0: #{base_encoder_forward.20}
  #allocation0 [shape = 'u32[]', space=smem, size = 0x4, offset = 0x4, fixed_abs, tag = 'smem constant byte address 0x4 - core index']
  #allocation1 [shape = 'u32[72,128]{1,0:T(1,128)}', space=vmem, size = 0x9000, scoped, tag = 'internal scratch']
  %s0 = inlined_call_operand.vmem [shape: bf16[16,32], index: 0, kind: input, shape index: {}]
  %s1 = inlined_call_operand.vmem [shape: bf16[32,32], index: 1, kind: input, shape index: {}]
  %s2 = inlined_call_operand.vmem [shape: f32[1,32], index: 2, kind: input, shape index: {}]
  %s3 = inlined_call_operand.vmem [shape: bf16[16,32], index: 3, kind: input, shape index: {}]
  %s4 = inlined_call_operand.vmem [shape: bf16[16,32], index: 4, kind: output, shape index: {}]
  %s5 = sld [smem:[#allocation0]]
  $region26: #{base_encoder_forward.20} parent=0
    _
  %s7 = ssub.s32 1, %s5
  %s8 = scalar_select 0, %s7, %s5
  // Predicated region
  $region2: #{base_encoder_forward.20} parent=0 // pred_check
    _
  $region3: #{base_encoder_forward.20} parent=0 // pred_check_branch
    %10 = sbr.rel (0) target = $region5
  $region4: #{base_encoder_forward.20} parent=0 // pred_region
    _
  $region5: #{base_encoder_forward.20} parent=0 // pred_fallthru
    _
  // Predicated region
  $region6: #{base_encoder_forward.20} parent=0 // pred_check
    _
  $region7: #{base_encoder_forward.20} parent=0 // pred_check_branch
    %12 = sbr.rel (0) target = $region9
  $region8: #{base_encoder_forward.20} parent=0 // pred_region
    _
  $region9: #{base_encoder_forward.20} parent=0 // pred_fallthru
    _
  // Predicated region
  $region10: #{base_encoder_forward.20} parent=0 // pred_check
    _
  $region11: #{base_encoder_forward.20} parent=0 // pred_check_branch
    %14 = sbr.rel (0) target = $region13
  $region12: #{base_encoder_forward.20} parent=0 // pred_region
    _
  $region13: #{base_encoder_forward.20} parent=0 // pred_fallthru
    _
  // Predicated region
  $region14: #{base_encoder_forward.20} parent=0 // pred_check
    _
  $region15: #{base_encoder_forward.20} parent=0 // pred_check_branch
    %16 = sbr.rel (0) target = $region17
  $region16: #{base_encoder_forward.20} parent=0 // pred_region
    _
  $region17: #{base_encoder_forward.20} parent=0 // pred_fallthru
    _
  %v18 = vld [vmem:[%s0] sm:$0xf]
  %v19 = vld [vmem:[%s0 + $0x4] sm:$0xf]
  %v20 = vld [vmem:[%s1] sm:$0xf]
  %v21 = vld [vmem:[%s1 + $0x4] sm:$0xf]
  %v22 = vld [vmem:[%s1 + $0x8] sm:$0xf]
  %v23 = vld [vmem:[%s1 + $0xc] sm:$0xf]
  %v24 = vld [vmem:[%s2] sm:$0x1]
  %v26 = vperm.slane %v24, 0
  %v30 = vunpack.c.l.b16 %v18
  %v31 = vunpack.c.l.b16 %v19
  %v32 = vpack.c.b16 %v31, %v30
  %v37 = vunpack.c.l.b16 %v20
  %v38 = vunpack.c.l.b16 %v21
  %v39 = vunpack.c.l.b16 %v22
  %v40 = vunpack.c.l.b16 %v23
  %v41 = vpack.c.b16 %v38, %v37
  %v42 = vpack.c.b16 %v40, %v39
  %vm45 = vcmask 261120
  %v47 = vsel %vm45, %v32, 0
  %49 = vmatpush.bf16.msra.mxu0 0
  %50 = vmatpush.bf16.msra.mxu0 0
  %51 = vmatpush.bf16.msra.mxu0 0
  %52 = vmatpush.bf16.msra.mxu0 0
  %53 = vmatpush.bf16.msra.mxu0 0
  %54 = vmatpush.bf16.msra.mxu0 0
  %55 = vmatpush.bf16.msra.mxu0 %v42
  %56 = vmatpush.bf16.msra.mxu0 %v41
  %57 = vmatmul.bf16.gmra.mxu0 %v47
  %v58 = vpop.f32.mrf.mxu0
  %v59 = vadd.f32 %v26, %v58
  %v60 = vpop.f32.mrf.mxu0
  %v61 = vadd.f32 %v26, %v60
  %62 = vdwg.mxu0
  %v63 = vld [vmem:[%s3] sm:$0xf]
  %v64 = vld [vmem:[%s3 + $0x4] sm:$0xf]
  %v65 = vunpack.c.l.bf16 %v63
  %v66 = vunpack.c.l.bf16 %v64
  %v67 = vadd.f32 %v59, %v65
  %v68 = vadd.f32 %v61, %v66
  %v69 = vpack.c.bf16 %v67, %v67
  %v70 = vpack.c.bf16 %v68, %v68
  %vm71 = vcmask 257024
  %72 = vst.msk [vmem:[%s4] sm:$0xf] %vm71, %v69
  %73 = vst.msk [vmem:[%s4 + $0x4] sm:$0xf] %vm71, %v70
  // Predicated region
  $region18: #{base_encoder_forward.20} parent=0 // pred_check
    _
  $region19: #{base_encoder_forward.20} parent=0 // pred_check_branch
    %75 = sbr.rel (0) target = $region21
  $region20: #{base_encoder_forward.20} parent=0 // pred_region
    _
  $region21: #{base_encoder_forward.20} parent=0 // pred_fallthru
    _
  // Predicated region
  $region22: #{base_encoder_forward.20} parent=0 // pred_check
    _
  $region23: #{base_encoder_forward.20} parent=0 // pred_check_branch
    %77 = sbr.rel (0) target = $region25
  $region24: #{base_encoder_forward.20} parent=0 // pred_region
    _
  $region25: #{base_encoder_forward.20} parent=0 // pred_fallthru
    _

// kernel: base_encoder_forward.21
$region0: #{base_encoder_forward.21}
  #allocation0 [shape = 'u32[]', space=smem, size = 0x4, offset = 0x4, fixed_abs, tag = 'smem constant byte address 0x4 - core index']
  #allocation1 [shape = 'u32[72,128]{1,0:T(1,128)}', space=vmem, size = 0x9000, scoped, tag = 'internal scratch']
  %s0 = inlined_call_operand.vmem [shape: bf16[16,32], index: 0, kind: input, shape index: {}]
  %s1 = inlined_call_operand.vmem [shape: f32[1,32], index: 1, kind: input, shape index: {}]
  %s2 = inlined_call_operand.vmem [shape: f32[1,32], index: 2, kind: input, shape index: {}]
  %s3 = inlined_call_operand.vmem [shape: bf16[32,64], index: 3, kind: input, shape index: {}]
  %s4 = inlined_call_operand.vmem [shape: f32[1,64], index: 4, kind: input, shape index: {}]
  %s5 = inlined_call_operand.vmem [shape: bf16[16,64], index: 5, kind: output, shape index: {}]
  %s6 = sld [smem:[#allocation0]]
  $region30: #{base_encoder_forward.21} parent=0
    _
  %s8 = ssub.s32 1, %s6
  %s9 = scalar_select 0, %s8, %s6
  // Predicated region
  $region2: #{base_encoder_forward.21} parent=0 // pred_check
    _
  $region3: #{base_encoder_forward.21} parent=0 // pred_check_branch
    %11 = sbr.rel (0) target = $region5
  $region4: #{base_encoder_forward.21} parent=0 // pred_region
    _
  $region5: #{base_encoder_forward.21} parent=0 // pred_fallthru
    _
  // Predicated region
  $region6: #{base_encoder_forward.21} parent=0 // pred_check
    _
  $region7: #{base_encoder_forward.21} parent=0 // pred_check_branch
    %13 = sbr.rel (0) target = $region9
  $region8: #{base_encoder_forward.21} parent=0 // pred_region
    _
  $region9: #{base_encoder_forward.21} parent=0 // pred_fallthru
    _
  // Predicated region
  $region10: #{base_encoder_forward.21} parent=0 // pred_check
    _
  $region11: #{base_encoder_forward.21} parent=0 // pred_check_branch
    %15 = sbr.rel (0) target = $region13
  $region12: #{base_encoder_forward.21} parent=0 // pred_region
    _
  $region13: #{base_encoder_forward.21} parent=0 // pred_fallthru
    _
  // Predicated region
  $region14: #{base_encoder_forward.21} parent=0 // pred_check
    _
  $region15: #{base_encoder_forward.21} parent=0 // pred_check_branch
    %17 = sbr.rel (0) target = $region17
  $region16: #{base_encoder_forward.21} parent=0 // pred_region
    _
  $region17: #{base_encoder_forward.21} parent=0 // pred_fallthru
    _
  // Predicated region
  $region18: #{base_encoder_forward.21} parent=0 // pred_check
    _
  $region19: #{base_encoder_forward.21} parent=0 // pred_check_branch
    %19 = sbr.rel (0) target = $region21
  $region20: #{base_encoder_forward.21} parent=0 // pred_region
    _
  $region21: #{base_encoder_forward.21} parent=0 // pred_fallthru
    _
  %v21 = vld [vmem:[%s0] sm:$0xf]
  %v22 = vld [vmem:[%s0 + $0x4] sm:$0xf]
  %v23 = vunpack.c.l.bf16 %v21
  %v24 = vunpack.c.l.bf16 %v22
  %vm25 = vcmask 261120
  %v26 = vsel %vm25, %v23, 0.0
  %27 = vadd.xlane.f32.xlu0 %v26
  %v28 = vpop.xlane.xlu0 %27
  %v29 = vsel %vm25, %v24, 0.0
  %30 = vadd.xlane.f32.xlu0 %v29
  %v31 = vpop.xlane.xlu0 %30
  %v32 = vrcp.pop 32.0
  %v33 = vmul.f32 32.0, %v32
  %v34 = vsub.f32 1.0, %v33
  %v35 = vmul.f32 %v32, %v34
  %v36 = vadd.f32 %v32, %v35
  %vm37 = vweird.f32 %v32
  %v38 = vsel %vm37, %v32, %v36
  %v39 = vmul.f32 %v28, %v38
  %v40 = vmul.f32 %v31, %v38
  %v41 = vsub.f32 %v23, %v39
  %v42 = vsub.f32 %v24, %v40
  %v43 = vmul.f32 %v41, %v41
  %v44 = vmul.f32 %v42, %v42
  %v45 = vsel %vm25, %v43, 0.0
  %46 = vadd.xlane.f32.xlu0 %v45
  %v47 = vpop.xlane.xlu0 %46
  %v48 = vsel %vm25, %v44, 0.0
  %49 = vadd.xlane.f32.xlu0 %v48
  %v50 = vpop.xlane.xlu0 %49
  %v51 = vmul.f32 %v47, %v38
  %v52 = vmul.f32 %v50, %v38
  %v53 = vadd.f32 %v51, 1e-05
  %v54 = vadd.f32 %v52, 1e-05
  %v55 = vrsqrt.pop %v53
  %v56 = vmul.f32 %v55, %v53
  %v57 = vmul.f32 %v56, %v55
  %v58 = vmul.f32 0.5, %v57
  %v59 = vsub.f32 1.5, %v58
  %v60 = vmul.f32 %v55, %v59
  %vm61 = vweird.f32 %v53
  %vm62 = vweird.f32 %v55
  %vm63 = vmor %vm61, %vm62
  %v64 = vsel %vm63, %v55, %v60
  %v65 = vrsqrt.pop %v54
  %v66 = vmul.f32 %v65, %v54
  %v67 = vmul.f32 %v66, %v65
  %v68 = vmul.f32 0.5, %v67
  %v69 = vsub.f32 1.5, %v68
  %v70 = vmul.f32 %v65, %v69
  %vm71 = vweird.f32 %v54
  %vm72 = vweird.f32 %v65
  %vm73 = vmor %vm71, %vm72
  %v74 = vsel %vm73, %v65, %v70
  %v75 = vmul.f32 %v41, %v64
  %v76 = vmul.f32 %v42, %v74
  %v77 = vld [vmem:[%s1] sm:$0x1]
  %v79 = vperm.slane %v77, 0
  %v81 = vmul.f32 %v75, %v79
  %v82 = vmul.f32 %v76, %v79
  %v83 = vld [vmem:[%s2] sm:$0x1]
  %v85 = vperm.slane %v83, 0
  %v87 = vadd.f32 %v81, %v85
  %v88 = vadd.f32 %v82, %v85
  %v89 = vpack.c.bf16 %v88, %v87
  %v90 = vld [vmem:[%s3] sm:$0xf]
  %v91 = vld [vmem:[%s3 + $0x4] sm:$0xf]
  %v92 = vld [vmem:[%s3 + $0x8] sm:$0xf]
  %v93 = vld [vmem:[%s3 + $0xc] sm:$0xf]
  %v94 = vld [vmem:[%s4] sm:$0x1]
  %v96 = vperm.slane %v94, 0
  %v102 = vunpack.c.l.b16 %v90
  %v103 = vunpack.c.l.b16 %v91
  %v104 = vunpack.c.l.b16 %v92
  %v105 = vunpack.c.l.b16 %v93
  %v106 = vpack.c.b16 %v103, %v102
  %v107 = vpack.c.b16 %v105, %v104
  %v111 = vsel %vm25, %v89, 0
  %113 = vmatpush.bf16.msra.mxu0 0
  %114 = vmatpush.bf16.msra.mxu0 0
  %115 = vmatpush.bf16.msra.mxu0 0
  %116 = vmatpush.bf16.msra.mxu0 0
  %117 = vmatpush.bf16.msra.mxu0 0
  %118 = vmatpush.bf16.msra.mxu0 0
  %119 = vmatpush.bf16.msra.mxu0 %v107
  %120 = vmatpush.bf16.msra.mxu0 %v106
  %121 = vmatmul.bf16.gmra.mxu0 %v111
  %v122 = vpop.f32.mrf.mxu0
  %v123 = vadd.f32 %v96, %v122
  %v124 = vpop.f32.mrf.mxu0
  %v125 = vadd.f32 %v96, %v124
  %126 = vdwg.mxu0
  %v127 = vmax.f32 %v123, 0.0
  %v128 = vmax.f32 %v125, 0.0
  %v129 = vpack.c.bf16 %v127, %v127
  %v130 = vpack.c.bf16 %v128, %v128
  %vm131 = vcmask 519168
  %132 = vst.msk [vmem:[%s5] sm:$0xf] %vm131, %v129
  %133 = vst.msk [vmem:[%s5 + $0x4] sm:$0xf] %vm131, %v130
  // Predicated region
  $region22: #{base_encoder_forward.21} parent=0 // pred_check
    _
  $region23: #{base_encoder_forward.21} parent=0 // pred_check_branch
    %135 = sbr.rel (0) target = $region25
  $region24: #{base_encoder_forward.21} parent=0 // pred_region
    _
  $region25: #{base_encoder_forward.21} parent=0 // pred_fallthru
    _
  // Predicated region
  $region26: #{base_encoder_forward.21} parent=0 // pred_check
    _
  $region27: #{base_encoder_forward.21} parent=0 // pred_check_branch
    %137 = sbr.rel (0) target = $region29
  $region28: #{base_encoder_forward.21} parent=0 // pred_region
    _
  $region29: #{base_encoder_forward.21} parent=0 // pred_fallthru
    _

// kernel: base_encoder_forward.19
$region0: #{base_encoder_forward.19}
  #allocation0 [shape = 'u32[]', space=smem, size = 0x4, offset = 0x4, fixed_abs, tag = 'smem constant byte address 0x4 - core index']
  #allocation1 [shape = 'u32[72,128]{1,0:T(1,128)}', space=vmem, size = 0x9000, scoped, tag = 'internal scratch']
  %s0 = inlined_call_operand.vmem [shape: bf16[2,8,96], index: 0, kind: input, shape index: {}]
  %s1 = inlined_call_operand.vmem [shape: f32[2,1,8], index: 1, kind: input, shape index: {}]
  %s2 = inlined_call_operand.vmem [shape: bf16[2,8,32], index: 2, kind: output, shape index: {}]
  %s3 = sld [smem:[#allocation0]]
  $region41: #{base_encoder_forward.19} parent=0
    _
  %s5 = ssub.s32 1, %s3
  %s6 = scalar_select 0, %s5, %s3
  loop: start=0, step=1, limit=4
  $region2: #{base_encoder_forward.19} parent=0 // loop_pre_header
    _
  $region3: #{base_encoder_forward.19} parent=0 // loop_header
    %s8 = sphi 0, %s12
    %p9 = scmp.ge.s32.totalorder %s8, 4
    %s18 = sphi 0, %s20
    %s21 = sphi 0, %s18
    %s22 = sphi 0, %s21
    %s38 = sphi 0, %s22
    %s44 = sphi 0, %s46
    %s47 = sphi 0, %s44
    %s48 = sphi 0, %s47
    %s64 = sphi 0, %s48
    %s70 = sphi 0, %s72
    %s73 = sphi 0, %s70
    %s74 = sphi 0, %s73
    %s90 = sphi 0, %s74
  $region4: #{base_encoder_forward.19} parent=0 // loop_header_branch
    %11 = sbr.rel (%p9) target = $region8
  $region5: #{base_encoder_forward.19} parent=0 // loop_body
    %s13 = ssub.s32 %s8, 1
    %s14 = ssub.s32 %s8, 2
    %s15 = sadd.s32 %s8, 1
    %s16 = ssub.s32 %s8, %s15
    %p17 = scmp.eq.s32.totalorder %s16, 0
    %s19 = sadd.s32 %s18, 1
    %s20 = scalar_select %p17, %s18, %s19
    %p23 = pneg %p17
    %p24 = scmp.eq.s32.totalorder %s8, 1
    %p25 = por %p23, %p24
    %p26 = scmp.ne.s32.totalorder %s18, %s21
    %p27 = scmp.eq.s32.totalorder %s8, 0
    %p28 = por %p26, %p27
    %p29 = scmp.ne.s32.totalorder %s18, %s21
    %p30 = scmp.eq.s32.totalorder %s13, 1
    %p31 = por %p29, %p30
    %p32 = scmp.ne.s32.totalorder %s21, %s22
    %p33 = scmp.eq.s32.totalorder %s13, 0
    %p34 = por %p32, %p33
    %p35 = scmp.ne.s32.totalorder %s21, %s22
    %p36 = scmp.eq.s32.totalorder %s14, 1
    %p37 = por %p35, %p36
    %p39 = scmp.ne.s32.totalorder %s22, %s38
    %p40 = scmp.eq.s32.totalorder %s14, 0
    %p41 = por %p39, %p40
    %s42 = ssub.s32 %s8, %s15
    %p43 = scmp.eq.s32.totalorder %s42, 0
    %s45 = sadd.s32 %s44, 1
    %s46 = scalar_select %p43, %s44, %s45
    %p49 = pneg %p43
    %p50 = scmp.eq.s32.totalorder %s8, 1
    %p51 = por %p49, %p50
    %p52 = scmp.ne.s32.totalorder %s44, %s47
    %p53 = scmp.eq.s32.totalorder %s8, 0
    %p54 = por %p52, %p53
    %p55 = scmp.ne.s32.totalorder %s44, %s47
    %p56 = scmp.eq.s32.totalorder %s13, 1
    %p57 = por %p55, %p56
    %p58 = scmp.ne.s32.totalorder %s47, %s48
    %p59 = scmp.eq.s32.totalorder %s13, 0
    %p60 = por %p58, %p59
    %p61 = scmp.ne.s32.totalorder %s47, %s48
    %p62 = scmp.eq.s32.totalorder %s14, 1
    %p63 = por %p61, %p62
    %p65 = scmp.ne.s32.totalorder %s48, %s64
    %p66 = scmp.eq.s32.totalorder %s14, 0
    %p67 = por %p65, %p66
    %s68 = ssub.s32 %s8, %s15
    %p69 = scmp.eq.s32.totalorder %s68, 0
    %s71 = sadd.s32 %s70, 1
    %s72 = scalar_select %p69, %s70, %s71
    %p75 = pneg %p69
    %p76 = scmp.eq.s32.totalorder %s8, 1
    %p77 = por %p75, %p76
    %p78 = scmp.ne.s32.totalorder %s70, %s73
    %p79 = scmp.eq.s32.totalorder %s8, 0
    %p80 = por %p78, %p79
    %p81 = scmp.ne.s32.totalorder %s70, %s73
    %p82 = scmp.eq.s32.totalorder %s13, 1
    %p83 = por %p81, %p82
    %p84 = scmp.ne.s32.totalorder %s73, %s74
    %p85 = scmp.eq.s32.totalorder %s13, 0
    %p86 = por %p84, %p85
    %p87 = scmp.ne.s32.totalorder %s73, %s74
    %p88 = scmp.eq.s32.totalorder %s14, 1
    %p89 = por %p87, %p88
    %p91 = scmp.ne.s32.totalorder %s74, %s90
    %p92 = scmp.eq.s32.totalorder %s14, 0
    %p93 = por %p91, %p92
    %p94 = scmp.le.s32.totalorder 1, %s8
    %p95 = scmp.lt.s32.totalorder %s8, 3
    %p96 = pnand %p94, %p95
    %p97 = pneg %p96
    // Predicated region
    $region9: #{base_encoder_forward.19} parent=5 // pred_check
      _
    $region10: #{base_encoder_forward.19} parent=5 // pred_check_branch
      %99 = sbr.rel (%p96) target = $region12
    $region11: #{base_encoder_forward.19} parent=5 // pred_region
      %s100 = ssub.s32 %s8, 1
    $region12: #{base_encoder_forward.19} parent=5 // pred_fallthru
      _
    %p101 = scmp.lt.s32.totalorder %s8, 2
    // Predicated region
    $region13: #{base_encoder_forward.19} parent=5 // pred_check
      %p102 = pneg %p101
    $region14: #{base_encoder_forward.19} parent=5 // pred_check_branch
      %104 = sbr.rel (%p102) target = $region16
    $region15: #{base_encoder_forward.19} parent=5 // pred_region
      // Predicated region
      $region17: #{base_encoder_forward.19} parent=15 // pred_check
        %p105 = pneg %p28
      $region18: #{base_encoder_forward.19} parent=15 // pred_check_branch
        %107 = sbr.rel (%p105) target = $region20
      $region19: #{base_encoder_forward.19} parent=15 // pred_region
        %p108 = scmp.lt.s32.totalorder %s8, 1
        %s109 = scalar_select %p108, %s8, 1
        %s110 = smul.addr %s109, 4
        %s111 = scalar_lea.vmem %s0, %s110
      $region20: #{base_encoder_forward.19} parent=15 // pred_fallthru
        _
      // Predicated region
      $region21: #{base_encoder_forward.19} parent=15 // pred_check
        %p112 = pneg %p54
      $region22: #{base_encoder_forward.19} parent=15 // pred_check_branch
        %114 = sbr.rel (%p112) target = $region24
      $region23: #{base_encoder_forward.19} parent=15 // pred_region
        %p115 = scmp.lt.s32.totalorder %s8, 1
        %s116 = scalar_select %p115, %s8, 1
        %s117 = scalar_lea.vmem %s1, %s116
      $region24: #{base_encoder_forward.19} parent=15 // pred_fallthru
        _
    $region16: #{base_encoder_forward.19} parent=5 // pred_fallthru
      _
    %p118 = scmp.le.s32.totalorder 1, %s8
    %p119 = scmp.lt.s32.totalorder %s8, 3
    %p120 = pnand %p118, %p119
    %p121 = pneg %p120
    // Predicated region
    $region25: #{base_encoder_forward.19} parent=5 // pred_check
      _
    $region26: #{base_encoder_forward.19} parent=5 // pred_check_branch
      %123 = sbr.rel (%p120) target = $region28
    $region27: #{base_encoder_forward.19} parent=5 // pred_region
      %s124 = ssub.s32 %s8, 1
      %p125 = scmp.lt.s32.totalorder %s13, 1
      %s126 = scalar_select %p125, %s13, 1
      %s127 = smul.addr %s126, 4
      %s128 = scalar_lea.vmem %s0, %s127
      %p129 = pneg %p34
      %p130 = pneg %p31
      %p131 = scmp.lt.s32.totalorder %s13, 1
      %s132 = scalar_select %p131, %s13, 1
      %s133 = scalar_lea.vmem %s1, %s132
      %p134 = pneg %p60
      %p135 = pneg %p57
      %p136 = pneg %p86
      %p137 = pneg %p83
      %p138 = scmp.lt.s32.totalorder %s13, 1
      %s139 = scalar_select %p138, %s13, 1
      %s140 = smul.addr %s139, 4
      %s141 = scalar_lea.vmem %s2, %s140
      %p142 = scmp.lt.s32.totalorder %s13, 1
      %s143 = scalar_select %p142, %s13, 1
      %s144 = smul.addr %s143, 4
      %s145 = scalar_lea.vmem %s0, %s144
      %p146 = scmp.lt.s32.totalorder %s13, 1
      %s147 = scalar_select %p146, %s13, 1
      %s148 = scalar_lea.vmem %s1, %s147
      %p149 = scmp.lt.s32.totalorder %s13, 1
      %s150 = scalar_select %p149, %s13, 1
      %s151 = smul.addr %s150, 4
      %s152 = scalar_lea.vmem %s2, %s151
      %v154 = vld [vmem:[%s145] sm:$0xf]
      %v155 = vld [vmem:[%s148] sm:$0x1]
      %v156 = vsub.f32 1.0, %v155
      %v157 = vmul.f32 %v156, -1e+30
      %v159 = vperm.slane %v157, 0
      %v162 = vunpack.c.l.b16 %v154
      %v163 = vpack.c.b16 %v162, %v162
      %164 = vrot.lane.b32.xlu0 %v163, 96
      %v165 = vpop.permute.xlu0 %164
      %vm166 = vcmask 64512
      %v168 = vsel %vm166, %v154, 0
      %v171 = vsel %vm166, %v165, 0
      %173 = vmatpush.bf16.xpose.msra.mxu0 0
      %174 = vmatpush.bf16.xpose.msra.mxu0 0
      %175 = vmatpush.bf16.xpose.msra.mxu0 0
      %176 = vmatpush.bf16.xpose.msra.mxu0 0
      %177 = vmatpush.bf16.xpose.msra.mxu0 0
      %178 = vmatpush.bf16.xpose.msra.mxu0 0
      %179 = vmatpush.bf16.xpose.msra.mxu0 0
      %180 = vmatpush.bf16.xpose.msra.mxu0 %v171
      %181 = vmatmul.bf16.gmra.mxu0 %v168
      %v182 = vpop.f32.mrf.mxu0
      %v183 = vadd.f32 %v159, %v182
      %v184 = vpop.f32.mrf.mxu0
      %185 = vdwg.mxu0
      %v186 = vsel %vm166, %v183, -inf
      %187 = vmax.xlane.f32.xlu0 %v186
      %v188 = vpop.xlane.xlu0 %187
      %v189 = vsub.f32 %v183, %v188
      %v190 = vmul.f32 %v189, 1.442695
      %v191 = vpow.pop %v190
      %v192 = vsel %vm166, %v191, 0.0
      %193 = vadd.xlane.f32.xlu0 %v192
      %v194 = vpop.xlane.xlu0 %193
      %v195 = vrcp.pop %v194
      %v196 = vmul.f32 %v191, %v195
      %v197 = vpack.c.bf16 %v196, %v196
      %198 = vrot.lane.b32.xlu0 %v163, 64
      %v199 = vpop.permute.xlu0 %198
      %v201 = vsel %vm166, %v197, 0
      %vm203 = vcmask 1043456
      %v205 = vsel %vm203, %v199, 0
      %207 = vmatpush.bf16.msra.mxu0 0
      %208 = vmatpush.bf16.msra.mxu0 0
      %209 = vmatpush.bf16.msra.mxu0 0
      %210 = vmatpush.bf16.msra.mxu0 0
      %211 = vmatpush.bf16.msra.mxu0 0
      %212 = vmatpush.bf16.msra.mxu0 0
      %213 = vmatpush.bf16.msra.mxu0 0
      %214 = vmatpush.bf16.msra.mxu0 %v205
      %215 = vmatmul.bf16.gmra.mxu0 %v201
      %v216 = vpop.f32.mrf.mxu0
      %v217 = vadd.f32 0.0, %v216
      %v218 = vpop.f32.mrf.mxu0
      %219 = vdwg.mxu0
      %v220 = vpack.c.bf16 %v217, %v217
      %vm221 = vcmask 60416
      %222 = vst.msk [vmem:[%s152] sm:$0xf] %vm221, %v220
      %223 = vrot.lane.b32.xlu0 %v163, 120
      %v224 = vpop.permute.xlu0 %223
      %225 = vrot.lane.b32.xlu0 %v163, 88
      %v226 = vpop.permute.xlu0 %225
      %v228 = vsel %vm166, %v224, 0
      %v231 = vsel %vm166, %v226, 0
      %233 = vmatpush.bf16.xpose.msra.mxu0 0
      %234 = vmatpush.bf16.xpose.msra.mxu0 0
      %235 = vmatpush.bf16.xpose.msra.mxu0 0
      %236 = vmatpush.bf16.xpose.msra.mxu0 0
      %237 = vmatpush.bf16.xpose.msra.mxu0 0
      %238 = vmatpush.bf16.xpose.msra.mxu0 0
      %239 = vmatpush.bf16.xpose.msra.mxu0 0
      %240 = vmatpush.bf16.xpose.msra.mxu0 %v231
      %241 = vmatmul.bf16.gmra.mxu0 %v228
      %v242 = vpop.f32.mrf.mxu0
      %v243 = vadd.f32 %v159, %v242
      %v244 = vpop.f32.mrf.mxu0
      %245 = vdwg.mxu0
      %v246 = vsel %vm166, %v243, -inf
      %247 = vmax.xlane.f32.xlu0 %v246
      %v248 = vpop.xlane.xlu0 %247
      %v249 = vsub.f32 %v243, %v248
      %v250 = vmul.f32 %v249, 1.442695
      %v251 = vpow.pop %v250
      %v252 = vsel %vm166, %v251, 0.0
      %253 = vadd.xlane.f32.xlu0 %v252
      %v254 = vpop.xlane.xlu0 %253
      %v255 = vrcp.pop %v254
      %v256 = vmul.f32 %v251, %v255
      %v257 = vpack.c.bf16 %v256, %v256
      %258 = vrot.lane.b32.xlu0 %v163, 56
      %v259 = vpop.permute.xlu0 %258
      %v261 = vsel %vm166, %v257, 0
      %v264 = vsel %vm203, %v259, 0
      %266 = vmatpush.bf16.msra.mxu0 0
      %267 = vmatpush.bf16.msra.mxu0 0
      %268 = vmatpush.bf16.msra.mxu0 0
      %269 = vmatpush.bf16.msra.mxu0 0
      %270 = vmatpush.bf16.msra.mxu0 0
      %271 = vmatpush.bf16.msra.mxu0 0
      %272 = vmatpush.bf16.msra.mxu0 0
      %273 = vmatpush.bf16.msra.mxu0 %v264
      %274 = vmatmul.bf16.gmra.mxu0 %v261
      %v275 = vpop.f32.mrf.mxu0
      %v276 = vadd.f32 0.0, %v275
      %v277 = vpop.f32.mrf.mxu0
      %278 = vdwg.mxu0
      %v279 = vpack.c.bf16 %v276, %v276
      %281 = vrot.lane.b32.xlu0 %v279, 8
      %v282 = vpop.permute.xlu0 %281
      %vm284 = vcmask 126016
      %285 = vst.msk [vmem:[%s152] sm:$0xf] %vm284, %v282
      %286 = vrot.lane.b32.xlu0 %v163, 112
      %v287 = vpop.permute.xlu0 %286
      %288 = vrot.lane.b32.xlu0 %v163, 80
      %v289 = vpop.permute.xlu0 %288
      %v291 = vsel %vm166, %v287, 0
      %v294 = vsel %vm166, %v289, 0
      %296 = vmatpush.bf16.xpose.msra.mxu0 0
      %297 = vmatpush.bf16.xpose.msra.mxu0 0
      %298 = vmatpush.bf16.xpose.msra.mxu0 0
      %299 = vmatpush.bf16.xpose.msra.mxu0 0
      %300 = vmatpush.bf16.xpose.msra.mxu0 0
      %301 = vmatpush.bf16.xpose.msra.mxu0 0
      %302 = vmatpush.bf16.xpose.msra.mxu0 0
      %303 = vmatpush.bf16.xpose.msra.mxu0 %v294
      %304 = vmatmul.bf16.gmra.mxu0 %v291
      %v305 = vpop.f32.mrf.mxu0
      %v306 = vadd.f32 %v159, %v305
      %v307 = vpop.f32.mrf.mxu0
      %308 = vdwg.mxu0
      %v309 = vsel %vm166, %v306, -inf
      %310 = vmax.xlane.f32.xlu0 %v309
      %v311 = vpop.xlane.xlu0 %310
      %v312 = vsub.f32 %v306, %v311
      %v313 = vmul.f32 %v312, 1.442695
      %v314 = vpow.pop %v313
      %v315 = vsel %vm166, %v314, 0.0
      %316 = vadd.xlane.f32.xlu0 %v315
      %v317 = vpop.xlane.xlu0 %316
      %v318 = vrcp.pop %v317
      %v319 = vmul.f32 %v314, %v318
      %v320 = vpack.c.bf16 %v319, %v319
      %321 = vrot.lane.b32.xlu0 %v163, 48
      %v322 = vpop.permute.xlu0 %321
      %v324 = vsel %vm166, %v320, 0
      %v327 = vsel %vm203, %v322, 0
      %329 = vmatpush.bf16.msra.mxu0 0
      %330 = vmatpush.bf16.msra.mxu0 0
      %331 = vmatpush.bf16.msra.mxu0 0
      %332 = vmatpush.bf16.msra.mxu0 0
      %333 = vmatpush.bf16.msra.mxu0 0
      %334 = vmatpush.bf16.msra.mxu0 0
      %335 = vmatpush.bf16.msra.mxu0 0
      %336 = vmatpush.bf16.msra.mxu0 %v327
      %337 = vmatmul.bf16.gmra.mxu0 %v324
      %v338 = vpop.f32.mrf.mxu0
      %v339 = vadd.f32 0.0, %v338
      %v340 = vpop.f32.mrf.mxu0
      %341 = vdwg.mxu0
      %v342 = vpack.c.bf16 %v339, %v339
      %344 = vrot.lane.b32.xlu0 %v342, 16
      %v345 = vpop.permute.xlu0 %344
      %vm347 = vcmask 191616
      %348 = vst.msk [vmem:[%s152] sm:$0xf] %vm347, %v345
      %349 = vrot.lane.b32.xlu0 %v163, 104
      %v350 = vpop.permute.xlu0 %349
      %351 = vrot.lane.b32.xlu0 %v163, 72
      %v352 = vpop.permute.xlu0 %351
      %v354 = vsel %vm166, %v350, 0
      %v357 = vsel %vm166, %v352, 0
      %359 = vmatpush.bf16.xpose.msra.mxu0 0
      %360 = vmatpush.bf16.xpose.msra.mxu0 0
      %361 = vmatpush.bf16.xpose.msra.mxu0 0
      %362 = vmatpush.bf16.xpose.msra.mxu0 0
      %363 = vmatpush.bf16.xpose.msra.mxu0 0
      %364 = vmatpush.bf16.xpose.msra.mxu0 0
      %365 = vmatpush.bf16.xpose.msra.mxu0 0
      %366 = vmatpush.bf16.xpose.msra.mxu0 %v357
      %367 = vmatmul.bf16.gmra.mxu0 %v354
      %v368 = vpop.f32.mrf.mxu0
      %v369 = vadd.f32 %v159, %v368
      %v370 = vpop.f32.mrf.mxu0
      %371 = vdwg.mxu0
      %v372 = vsel %vm166, %v369, -inf
      %373 = vmax.xlane.f32.xlu0 %v372
      %v374 = vpop.xlane.xlu0 %373
      %v375 = vsub.f32 %v369, %v374
      %v376 = vmul.f32 %v375, 1.442695
      %v377 = vpow.pop %v376
      %v378 = vsel %vm166, %v377, 0.0
      %379 = vadd.xlane.f32.xlu0 %v378
      %v380 = vpop.xlane.xlu0 %379
      %v381 = vrcp.pop %v380
      %v382 = vmul.f32 %v377, %v381
      %v383 = vpack.c.bf16 %v382, %v382
      %384 = vrot.lane.b32.xlu0 %v163, 40
      %v385 = vpop.permute.xlu0 %384
      %v387 = vsel %vm166, %v383, 0
      %v390 = vsel %vm203, %v385, 0
      %392 = vmatpush.bf16.msra.mxu0 0
      %393 = vmatpush.bf16.msra.mxu0 0
      %394 = vmatpush.bf16.msra.mxu0 0
      %395 = vmatpush.bf16.msra.mxu0 0
      %396 = vmatpush.bf16.msra.mxu0 0
      %397 = vmatpush.bf16.msra.mxu0 0
      %398 = vmatpush.bf16.msra.mxu0 0
      %399 = vmatpush.bf16.msra.mxu0 %v390
      %400 = vmatmul.bf16.gmra.mxu0 %v387
      %v401 = vpop.f32.mrf.mxu0
      %v402 = vadd.f32 0.0, %v401
      %v403 = vpop.f32.mrf.mxu0
      %404 = vdwg.mxu0
      %v405 = vpack.c.bf16 %v402, %v402
      %407 = vrot.lane.b32.xlu0 %v405, 24
      %v408 = vpop.permute.xlu0 %407
      %vm410 = vcmask 257216
      %411 = vst.msk [vmem:[%s152] sm:$0xf] %vm410, %v408
      %p412 = scmp.lt.s32.totalorder %s13, 1
      %s413 = scalar_select %p412, %s13, 1
      %s414 = smul.addr %s413, 4
      %s415 = scalar_lea.vmem %s2, %s414
      // Predicated region
      $region29: #{base_encoder_forward.19} parent=27 // pred_check
        %p416 = pneg %p83
      $region30: #{base_encoder_forward.19} parent=27 // pred_check_branch
        %418 = sbr.rel (%p416) target = $region32
      $region31: #{base_encoder_forward.19} parent=27 // pred_region
        _
      $region32: #{base_encoder_forward.19} parent=27 // pred_fallthru
        _
    $region28: #{base_encoder_forward.19} parent=5 // pred_fallthru
      _
    %p419 = scmp.le.s32.totalorder 2, %s8
    // Predicated region
    $region33: #{base_encoder_forward.19} parent=5 // pred_check
      %p420 = pneg %p419
    $region34: #{base_encoder_forward.19} parent=5 // pred_check_branch
      %422 = sbr.rel (%p420) target = $region36
    $region35: #{base_encoder_forward.19} parent=5 // pred_region
      %s423 = ssub.s32 %s8, 2
      // Predicated region
      $region37: #{base_encoder_forward.19} parent=35 // pred_check
        %p424 = pneg %p89
      $region38: #{base_encoder_forward.19} parent=35 // pred_check_branch
        %426 = sbr.rel (%p424) target = $region40
      $region39: #{base_encoder_forward.19} parent=35 // pred_region
        %p427 = scmp.lt.s32.totalorder %s14, 1
        %s428 = scalar_select %p427, %s14, 1
        %s429 = smul.addr %s428, 4
        %s430 = scalar_lea.vmem %s2, %s429
      $region40: #{base_encoder_forward.19} parent=35 // pred_fallthru
        _
    $region36: #{base_encoder_forward.19} parent=5 // pred_fallthru
      _
  $region6: #{base_encoder_forward.19} parent=0 // loop_footer
    %s12 = sadd.s32 1, %s8
  $region7: #{base_encoder_forward.19} parent=0 // loop_footer_branch
    %7 = sbr.rel target = $region3
  $region8: #{base_encoder_forward.19} parent=0 // loop_exit
    _

// kernel: base_encoder_forward.22
$region0: #{base_encoder_forward.22}
  #allocation0 [shape = 'u32[]', space=smem, size = 0x4, offset = 0x4, fixed_abs, tag = 'smem constant byte address 0x4 - core index']
  #allocation1 [shape = 'u32[72,128]{1,0:T(1,128)}', space=vmem, size = 0x9000, scoped, tag = 'internal scratch']
  %s0 = inlined_call_operand.vmem [shape: bf16[16,64], index: 0, kind: input, shape index: {}]
  %s1 = inlined_call_operand.vmem [shape: bf16[64,32], index: 1, kind: input, shape index: {}]
  %s2 = inlined_call_operand.vmem [shape: f32[1,32], index: 2, kind: input, shape index: {}]
  %s3 = inlined_call_operand.vmem [shape: bf16[16,32], index: 3, kind: input, shape index: {}]
  %s4 = inlined_call_operand.vmem [shape: bf16[16,32], index: 4, kind: output, shape index: {}]
  %s5 = sld [smem:[#allocation0]]
  $region26: #{base_encoder_forward.22} parent=0
    _
  %s7 = ssub.s32 1, %s5
  %s8 = scalar_select 0, %s7, %s5
  // Predicated region
  $region2: #{base_encoder_forward.22} parent=0 // pred_check
    _
  $region3: #{base_encoder_forward.22} parent=0 // pred_check_branch
    %10 = sbr.rel (0) target = $region5
  $region4: #{base_encoder_forward.22} parent=0 // pred_region
    _
  $region5: #{base_encoder_forward.22} parent=0 // pred_fallthru
    _
  // Predicated region
  $region6: #{base_encoder_forward.22} parent=0 // pred_check
    _
  $region7: #{base_encoder_forward.22} parent=0 // pred_check_branch
    %12 = sbr.rel (0) target = $region9
  $region8: #{base_encoder_forward.22} parent=0 // pred_region
    _
  $region9: #{base_encoder_forward.22} parent=0 // pred_fallthru
    _
  // Predicated region
  $region10: #{base_encoder_forward.22} parent=0 // pred_check
    _
  $region11: #{base_encoder_forward.22} parent=0 // pred_check_branch
    %14 = sbr.rel (0) target = $region13
  $region12: #{base_encoder_forward.22} parent=0 // pred_region
    _
  $region13: #{base_encoder_forward.22} parent=0 // pred_fallthru
    _
  // Predicated region
  $region14: #{base_encoder_forward.22} parent=0 // pred_check
    _
  $region15: #{base_encoder_forward.22} parent=0 // pred_check_branch
    %16 = sbr.rel (0) target = $region17
  $region16: #{base_encoder_forward.22} parent=0 // pred_region
    _
  $region17: #{base_encoder_forward.22} parent=0 // pred_fallthru
    _
  %v18 = vld [vmem:[%s0] sm:$0xf]
  %v19 = vld [vmem:[%s0 + $0x4] sm:$0xf]
  %v20 = vld [vmem:[%s1] sm:$0xf]
  %v21 = vld [vmem:[%s1 + $0x4] sm:$0xf]
  %v22 = vld [vmem:[%s1 + $0x8] sm:$0xf]
  %v23 = vld [vmem:[%s1 + $0xc] sm:$0xf]
  %v24 = vld [vmem:[%s1 + $0x10] sm:$0xf]
  %v25 = vld [vmem:[%s1 + $0x14] sm:$0xf]
  %v26 = vld [vmem:[%s1 + $0x18] sm:$0xf]
  %v27 = vld [vmem:[%s1 + $0x1c] sm:$0xf]
  %v28 = vld [vmem:[%s2] sm:$0x1]
  %v30 = vperm.slane %v28, 0
  %v34 = vunpack.c.l.b16 %v18
  %v35 = vunpack.c.l.b16 %v19
  %v36 = vpack.c.b16 %v35, %v34
  %v45 = vunpack.c.l.b16 %v20
  %v46 = vunpack.c.l.b16 %v21
  %v47 = vunpack.c.l.b16 %v22
  %v48 = vunpack.c.l.b16 %v23
  %v49 = vunpack.c.l.b16 %v24
  %v50 = vunpack.c.l.b16 %v25
  %v51 = vunpack.c.l.b16 %v26
  %v52 = vunpack.c.l.b16 %v27
  %v53 = vpack.c.b16 %v46, %v45
  %v54 = vpack.c.b16 %v48, %v47
  %v55 = vpack.c.b16 %v50, %v49
  %v56 = vpack.c.b16 %v52, %v51
  %vm61 = vcmask 523264
  %v63 = vsel %vm61, %v36, 0
  %65 = vmatpush.bf16.msra.mxu0 0
  %66 = vmatpush.bf16.msra.mxu0 0
  %67 = vmatpush.bf16.msra.mxu0 0
  %68 = vmatpush.bf16.msra.mxu0 0
  %69 = vmatpush.bf16.msra.mxu0 %v56
  %70 = vmatpush.bf16.msra.mxu0 %v55
  %71 = vmatpush.bf16.msra.mxu0 %v54
  %72 = vmatpush.bf16.msra.mxu0 %v53
  %73 = vmatmul.bf16.gmra.mxu0 %v63
  %v74 = vpop.f32.mrf.mxu0
  %v75 = vadd.f32 %v30, %v74
  %v76 = vpop.f32.mrf.mxu0
  %v77 = vadd.f32 %v30, %v76
  %78 = vdwg.mxu0
  %v79 = vld [vmem:[%s3] sm:$0xf]
  %v80 = vld [vmem:[%s3 + $0x4] sm:$0xf]
  %v81 = vunpack.c.l.bf16 %v79
  %v82 = vunpack.c.l.bf16 %v80
  %v83 = vadd.f32 %v75, %v81
  %v84 = vadd.f32 %v77, %v82
  %v85 = vpack.c.bf16 %v83, %v83
  %v86 = vpack.c.bf16 %v84, %v84
  %vm87 = vcmask 257024
  %88 = vst.msk [vmem:[%s4] sm:$0xf] %vm87, %v85
  %89 = vst.msk [vmem:[%s4 + $0x4] sm:$0xf] %vm87, %v86
  // Predicated region
  $region18: #{base_encoder_forward.22} parent=0 // pred_check
    _
  $region19: #{base_encoder_forward.22} parent=0 // pred_check_branch
    %91 = sbr.rel (0) target = $region21
  $region20: #{base_encoder_forward.22} parent=0 // pred_region
    _
  $region21: #{base_encoder_forward.22} parent=0 // pred_fallthru
    _
  // Predicated region
  $region22: #{base_encoder_forward.22} parent=0 // pred_check
    _
  $region23: #{base_encoder_forward.22} parent=0 // pred_check_branch
    %93 = sbr.rel (0) target = $region25
  $region24: #{base_encoder_forward.22} parent=0 // pred_region
    _
  $region25: #{base_encoder_forward.22} parent=0 // pred_fallthru
    _

// kernel: base_encoder_forward.28
$region0: #{base_encoder_forward.28}
  #allocation0 [shape = 'u32[]', space=smem, size = 0x4, offset = 0x4, fixed_abs, tag = 'smem constant byte address 0x4 - core index']
  #allocation1 [shape = 'u32[72,128]{1,0:T(1,128)}', space=vmem, size = 0x9000, scoped, tag = 'internal scratch']
  %s0 = inlined_call_operand.vmem [shape: bf16[16,32], index: 0, kind: input, shape index: {}]
  %s1 = inlined_call_operand.vmem [shape: f32[1,32], index: 1, kind: input, shape index: {}]
  %s2 = inlined_call_operand.vmem [shape: f32[1,32], index: 2, kind: input, shape index: {}]
  %s3 = inlined_call_operand.vmem [shape: f32[16,32], index: 3, kind: output, shape index: {}]
  %s4 = sld [smem:[#allocation0]]
  $region22: #{base_encoder_forward.28} parent=0
    _
  %s6 = ssub.s32 1, %s4
  %s7 = scalar_select 0, %s6, %s4
  // Predicated region
  $region2: #{base_encoder_forward.28} parent=0 // pred_check
    _
  $region3: #{base_encoder_forward.28} parent=0 // pred_check_branch
    %9 = sbr.rel (0) target = $region5
  $region4: #{base_encoder_forward.28} parent=0 // pred_region
    _
  $region5: #{base_encoder_forward.28} parent=0 // pred_fallthru
    _
  // Predicated region
  $region6: #{base_encoder_forward.28} parent=0 // pred_check
    _
  $region7: #{base_encoder_forward.28} parent=0 // pred_check_branch
    %11 = sbr.rel (0) target = $region9
  $region8: #{base_encoder_forward.28} parent=0 // pred_region
    _
  $region9: #{base_encoder_forward.28} parent=0 // pred_fallthru
    _
  // Predicated region
  $region10: #{base_encoder_forward.28} parent=0 // pred_check
    _
  $region11: #{base_encoder_forward.28} parent=0 // pred_check_branch
    %13 = sbr.rel (0) target = $region13
  $region12: #{base_encoder_forward.28} parent=0 // pred_region
    _
  $region13: #{base_encoder_forward.28} parent=0 // pred_fallthru
    _
  %v14 = vld [vmem:[%s0] sm:$0xf]
  %v15 = vld [vmem:[%s0 + $0x4] sm:$0xf]
  %v16 = vunpack.c.l.bf16 %v14
  %v17 = vunpack.c.l.bf16 %v15
  %vm18 = vcmask 261120
  %v19 = vsel %vm18, %v16, 0.0
  %20 = vadd.xlane.f32.xlu0 %v19
  %v21 = vpop.xlane.xlu0 %20
  %v22 = vsel %vm18, %v17, 0.0
  %23 = vadd.xlane.f32.xlu0 %v22
  %v24 = vpop.xlane.xlu0 %23
  %v25 = vrcp.pop 32.0
  %v26 = vmul.f32 32.0, %v25
  %v27 = vsub.f32 1.0, %v26
  %v28 = vmul.f32 %v25, %v27
  %v29 = vadd.f32 %v25, %v28
  %vm30 = vweird.f32 %v25
  %v31 = vsel %vm30, %v25, %v29
  %v32 = vmul.f32 %v21, %v31
  %v33 = vmul.f32 %v24, %v31
  %v34 = vsub.f32 %v16, %v32
  %v35 = vsub.f32 %v17, %v33
  %v36 = vmul.f32 %v34, %v34
  %v37 = vmul.f32 %v35, %v35
  %v38 = vsel %vm18, %v36, 0.0
  %39 = vadd.xlane.f32.xlu0 %v38
  %v40 = vpop.xlane.xlu0 %39
  %v41 = vsel %vm18, %v37, 0.0
  %42 = vadd.xlane.f32.xlu0 %v41
  %v43 = vpop.xlane.xlu0 %42
  %v44 = vmul.f32 %v40, %v31
  %v45 = vmul.f32 %v43, %v31
  %v46 = vadd.f32 %v44, 1e-05
  %v47 = vadd.f32 %v45, 1e-05
  %v48 = vrsqrt.pop %v46
  %v49 = vmul.f32 %v48, %v46
  %v50 = vmul.f32 %v49, %v48
  %v51 = vmul.f32 0.5, %v50
  %v52 = vsub.f32 1.5, %v51
  %v53 = vmul.f32 %v48, %v52
  %vm54 = vweird.f32 %v46
  %vm55 = vweird.f32 %v48
  %vm56 = vmor %vm54, %vm55
  %v57 = vsel %vm56, %v48, %v53
  %v58 = vrsqrt.pop %v47
  %v59 = vmul.f32 %v58, %v47
  %v60 = vmul.f32 %v59, %v58
  %v61 = vmul.f32 0.5, %v60
  %v62 = vsub.f32 1.5, %v61
  %v63 = vmul.f32 %v58, %v62
  %vm64 = vweird.f32 %v47
  %vm65 = vweird.f32 %v58
  %vm66 = vmor %vm64, %vm65
  %v67 = vsel %vm66, %v58, %v63
  %v68 = vmul.f32 %v34, %v57
  %v69 = vmul.f32 %v35, %v67
  %v70 = vld [vmem:[%s1] sm:$0x1]
  %v72 = vperm.slane %v70, 0
  %v74 = vmul.f32 %v68, %v72
  %v75 = vmul.f32 %v69, %v72
  %v76 = vld [vmem:[%s2] sm:$0x1]
  %v78 = vperm.slane %v76, 0
  %v80 = vadd.f32 %v74, %v78
  %v81 = vadd.f32 %v75, %v78
  %82 = vst.msk [vmem:[%s3] sm:$0xff] %vm18, %v80
  %83 = vst.msk [vmem:[%s3 + $0x8] sm:$0xff] %vm18, %v81
  // Predicated region
  $region14: #{base_encoder_forward.28} parent=0 // pred_check
    _
  $region15: #{base_encoder_forward.28} parent=0 // pred_check_branch
    %85 = sbr.rel (0) target = $region17
  $region16: #{base_encoder_forward.28} parent=0 // pred_region
    _
  $region17: #{base_encoder_forward.28} parent=0 // pred_fallthru
    _
  // Predicated region
  $region18: #{base_encoder_forward.28} parent=0 // pred_check
    _
  $region19: #{base_encoder_forward.28} parent=0 // pred_check_branch
    %87 = sbr.rel (0) target = $region21
  $region20: #{base_encoder_forward.28} parent=0 // pred_region
    _
  $region21: #{base_encoder_forward.28} parent=0 // pred_fallthru
    _

</llo_original>
